<compile_context>
chip_gen: v7x
topology: tpu7x:2x2x1
jax: 0.10.0
libtpu: 0.0.40
codegen_flags: <defaults>
</compile_context>

<pallas_src>
import functools

import jax
import jax.numpy as jnp
from jax import lax
from jax.experimental import pallas as pl
from jax.experimental.pallas import tpu as pltpu


# Residual stream dtype between layers (halves HBM read+write per layer).
_RESIDUAL_DTYPE = jnp.bfloat16


# ----------------------------------------------------------------------------
# Hardware-aware tiling helpers
# ----------------------------------------------------------------------------
def _vmem_capacity():
    """Physical VMEM per core; fall back to 128 MiB if the query fails."""
    try:
        return int(pltpu.get_tpu_info().vmem_capacity_bytes)
    except Exception:
        return 128 * 1024 * 1024


def _vmem_limit(cap):
    # Never request 100% of physical VMEM: leave headroom for the compiler's
    # internal scratch and the double-buffered sequence blocks.
    return int(min(cap * 3 // 4, 96 * 1024 * 1024))


def _choose_chunk(L, cap):
    """Largest sequence chunk (multiple of 8) dividing L; 256 only on 128-MiB
    parts (v5e/v6e), 128 otherwise (v7x)."""
    max_tl = 256 if cap >= 100 * 1024 * 1024 else 128
    for tl in (256, 128, 64, 32, 16, 8):
        if tl <= max_tl and L % tl == 0:
            return tl
    return L  # ragged/tiny fallback


def _choose_channel_tile(d_inner):
    """d_inner slab width for the scan: keeps the carried h slab plus one
    timestep of dA/dBx inside the vector-register file."""
    for td in (512, 256, 128):
        if d_inner % td == 0:
            return td
    return d_inner


def _choose_vocab_tile(vocab):
    for tn in (1024, 512, 256, 128):
        if vocab % tn == 0:
            return tn
    return vocab


def _round_up(n, m):
    return ((n + m - 1) // m) * m


@functools.lru_cache(maxsize=None)
def _single_buffer_kwargs():
    """Constant-index weight operands do not need double buffering.  Probe
    pipeline_mode=pl.Buffered(1) once; fall back silently if unsupported."""
    if not hasattr(pl, "Buffered"):
        return {}
    kw = {"pipeline_mode": pl.Buffered(1)}
    try:
        def _probe(x_ref, o_ref):
            o_ref[...] = x_ref[...] + 1.0

        fn = pl.pallas_call(
            _probe,
            out_shape=jax.ShapeDtypeStruct((8, 128), jnp.float32),
            grid_spec=pltpu.PrefetchScalarGridSpec(
                num_scalar_prefetch=0,
                grid=(1,),
                in_specs=[pl.BlockSpec((8, 128), lambda i: (0, 0), **kw)],
                out_specs=pl.BlockSpec((8, 128), lambda i: (0, 0))),
        )
        jax.block_until_ready(fn(jnp.zeros((8, 128), jnp.float32)))
        return kw
    except Exception:
        return {}


# ----------------------------------------------------------------------------
# Selective-SSM block kernel: grid = (batch, sequence-chunk)
# ----------------------------------------------------------------------------
def _ssm_block_kernel(x_ref, in_wx_ref, in_wz_ref, conv_w_ref, xproj_w_ref,
                      dtproj_w_ref, A_T_ref, vec_ref, out_w_ref, *rest,
                      d_conv, d_state, dt_rank, td, unroll, return_y):
    if return_y:
        out_ref, y_ref = rest[0], rest[1]
        xact_s, dt_s, bm_s, cm_s, ys_s, h_ref, convst_ref = rest[2:]
    else:
        out_ref, y_ref = rest[0], None
        xact_s, dt_s, bm_s, cm_s, ys_s, h_ref, convst_ref = rest[1:]

    TL = x_ref.shape[0]
    d_inner = ys_s.shape[1]
    pad = d_conv - 1
    S = d_state
    UB = unroll
    n_grp = TL // UB

    # Reset carried state (SSM hidden state + conv tail) at the first chunk of
    # every batch element.
    @pl.when(pl.program_id(1) == 0)
    def _():
        h_ref[...] = jnp.zeros_like(h_ref)
        convst_ref[...] = jnp.zeros_like(convst_ref)

    conv_b = vec_ref[0:1, :]
    dt_b = vec_ref[1:2, :]
    d_skip = vec_ref[2:3, :]
    mask = vec_ref[3:4, :]

    xb = x_ref[...].astype(jnp.bfloat16)

    # ---- in_proj (x branch), causal depthwise conv, SiLU, SDM mask ---------
    x_in = jnp.dot(xb, in_wx_ref[...], preferred_element_type=jnp.float32)
    if pad > 0:
        # Last (d_conv-1) inputs of the previous chunk are carried in VMEM
        # (== Conv1d(padding=d_conv-1)[..., :L]).
        xpad = jnp.concatenate([convst_ref[...], x_in], axis=0)
        convst_ref[...] = x_in[TL - pad:, :]
    else:
        xpad = x_in
    conv = xpad[0:TL, :] * conv_w_ref[0:1, :]
    for k in range(1, d_conv):
        conv = conv + xpad[k:k + TL, :] * conv_w_ref[k:k + 1, :]
    conv = conv + conv_b

    x_act = conv * jax.nn.sigmoid(conv)                       # SiLU
    x_act = x_act * mask                                      # SDM channel mask
    xact_s[...] = x_act
    xab = x_act.astype(jnp.bfloat16)

    # ---- fused, lane-padded x_proj (dt | B | C) + dt_proj ------------------
    xp = jnp.dot(xab, xproj_w_ref[...], preferred_element_type=jnp.float32)
    dt_r = xp[:, 0:dt_rank]
    bm_s[...] = xp[:, dt_rank:dt_rank + S]                    # (TL, S)
    cm_s[...] = xp[:, dt_rank + S:dt_rank + 2 * S]            # (TL, S)
    dt = jnp.dot(dt_r.astype(jnp.bfloat16), dtproj_w_ref[...],
                 preferred_element_type=jnp.float32)
    dt_s[...] = jax.nn.softplus(dt + dt_b)                    # (TL, d_inner)

    # ---- selective scan, tiled over d_inner channel slabs ------------------
    # dA = exp(dt*A) and dB*x are recomputed per timestep in registers (no
    # 3-D scratch); the h slab stays in vregs inside the fori_loop carry and
    # is written back to the persistent scratch once per slab.
    for lo in range(0, d_inner, td):
        A_slab = A_T_ref[:, lo:lo + td]                       # (S, td)

        def scan_group(o, h, lo=lo, A_slab=A_slab):
            base = pl.multiple_of(o * UB, UB)
            dt_g = dt_s[pl.ds(base, UB), lo:lo + td]          # (UB, td)
            xa_g = xact_s[pl.ds(base, UB), lo:lo + td]        # (UB, td)
            b_gT = bm_s[pl.ds(base, UB), :].T                 # (S, UB)
            c_gT = cm_s[pl.ds(base, UB), :].T                 # (S, UB)
            rows = []
            for u in range(UB):
                dtrow = dt_g[u:u + 1, :]                      # (1, td)
                dA = jnp.exp(dtrow * A_slab)                  # (S, td)
                dBx = b_gT[:, u:u + 1] * (dtrow * xa_g[u:u + 1, :])
                h = dA * h + dBx
                rows.append(jnp.sum(c_gT[:, u:u + 1] * h, axis=0,
                                    keepdims=True))           # (1, td)
            ys_s[pl.ds(base, UB), lo:lo + td] = jnp.concatenate(rows, axis=0)
            return h

        h_fin = lax.fori_loop(0, n_grp, scan_group, h_ref[:, lo:lo + td])
        h_ref[:, lo:lo + td] = h_fin

    # ---- skip connection, SiLU gate, out_proj, fused residual --------------
    z = jnp.dot(xb, in_wz_ref[...], preferred_element_type=jnp.float32)
    y = ys_s[...] + xact_s[...] * d_skip
    y = y * (z * jax.nn.sigmoid(z))
    y_out = jnp.dot(y.astype(jnp.bfloat16), out_w_ref[...],
                    preferred_element_type=jnp.float32)
    out_ref[...] = (x_ref[...].astype(jnp.float32) + y_out).astype(out_ref.dtype)
    if return_y:
        y_ref[...] = y_out.astype(y_ref.dtype)


def ssm_block(x, lp, vec, *, d_state, d_conv, dt_rank, return_y=False,
              out_dtype=_RESIDUAL_DTYPE):
    B, L, d_model = x.shape
    d_inner = lp["in_wx"].shape[1]
    cap = _vmem_capacity()
    TL = _choose_chunk(L, cap)
    pad = d_conv - 1
    assert TL >= pad, "sequence chunk shorter than conv receptive field"
    NC = L // TL
    UB = 8 if TL % 8 == 0 else 1
    TD = _choose_channel_tile(d_inner)

    kernel = functools.partial(_ssm_block_kernel, d_conv=d_conv, d_state=d_state,
                               dt_rank=dt_rank, td=TD, unroll=UB,
                               return_y=return_y)

    weights = (lp["in_wx"], lp["in_wz"], lp["conv_w"], lp["xproj_w"],
               lp["dtproj_w"], lp["A_T"], vec, lp["out_w"])

    sb = _single_buffer_kwargs()

    def w_spec(a):
        nd = a.ndim
        return pl.BlockSpec(a.shape, lambda b, l: (0,) * nd, **sb)

    in_specs = [pl.BlockSpec((None, TL, d_model), lambda b, l: (b, l, 0))]
    in_specs += [w_spec(a) for a in weights]

    seq_spec = pl.BlockSpec((None, TL, d_model), lambda b, l: (b, l, 0))
    main_shape = jax.ShapeDtypeStruct((B, L, d_model), out_dtype)
    if return_y:
        out_specs = (seq_spec,
                     pl.BlockSpec((None, TL, d_model), lambda b, l: (b, l, 0)))
        out_shape = (main_shape,
                     jax.ShapeDtypeStruct((B, L, d_model), jnp.float32))
    else:
        out_specs = seq_spec
        out_shape = main_shape

    scratch = [
        pltpu.VMEM((TL, d_inner), jnp.float32),       # masked SiLU(conv) act
        pltpu.VMEM((TL, d_inner), jnp.float32),       # softplus(dt)
        pltpu.VMEM((TL, d_state), jnp.float32),       # B(t)
        pltpu.VMEM((TL, d_state), jnp.float32),       # C(t)
        pltpu.VMEM((TL, d_inner), jnp.float32),       # scan output
        pltpu.VMEM((d_state, d_inner), jnp.float32),  # carried SSM state h
        pltpu.VMEM((max(pad, 1), d_inner), jnp.float32),  # carried conv tail
    ]

    return pl.pallas_call(
        kernel,
        out_shape=out_shape,
        grid_spec=pltpu.PrefetchScalarGridSpec(
            num_scalar_prefetch=0,
            grid=(B, NC),
            in_specs=in_specs,
            out_specs=out_specs,
            scratch_shapes=scratch),
        compiler_params=pltpu.CompilerParams(
            dimension_semantics=("parallel", "arbitrary"),
            vmem_limit_bytes=_vmem_limit(cap)),
    )(x, *weights)


# ----------------------------------------------------------------------------
# Final LayerNorm + lm_head kernel: grid = (batch, seq-tile, vocab-tile)
# LayerNorm is computed once per (b, seq-tile) and cached in VMEM scratch.
# ----------------------------------------------------------------------------
def _norm_head_kernel(x_ref, g_ref, b_ref, w_ref, o_ref, xn_s):
    @pl.when(pl.program_id(2) == 0)
    def _():
        x = x_ref[...].astype(jnp.float32)
        mu = jnp.mean(x, axis=-1, keepdims=True)
        xc = x - mu
        var = jnp.mean(xc * xc, axis=-1, keepdims=True)
        xn = xc * lax.rsqrt(var + 1e-5)
        xn_s[...] = (xn * g_ref[...] + b_ref[...]).astype(xn_s.dtype)

    o_ref[...] = jnp.dot(xn_s[...], w_ref[...],
                         preferred_element_type=jnp.float32)


def norm_head(x, gamma, beta, wT):
    B, L, d_model = x.shape
    vocab = wT.shape[1]
    cap = _vmem_capacity()
    TLH = _choose_chunk(L, cap)
    NLH = L // TLH
    TN = _choose_vocab_tile(vocab)
    NV = vocab // TN
    sb = _single_buffer_kwargs()

    return pl.pallas_call(
        _norm_head_kernel,
        out_shape=jax.ShapeDtypeStruct((B, L, vocab), jnp.float32),
        grid_spec=pltpu.PrefetchScalarGridSpec(
            num_scalar_prefetch=0,
            grid=(B, NLH, NV),
            in_specs=[
                pl.BlockSpec((None, TLH, d_model), lambda b, s, v: (b, s, 0)),
                pl.BlockSpec(gamma.shape, lambda b, s, v: (0, 0), **sb),
                pl.BlockSpec(beta.shape, lambda b, s, v: (0, 0), **sb),
                pl.BlockSpec((d_model, TN), lambda b, s, v: (0, v)),
            ],
            out_specs=pl.BlockSpec((None, TLH, TN), lambda b, s, v: (b, s, v)),
            scratch_shapes=[pltpu.VMEM((TLH, d_model), jnp.bfloat16)]),
        compiler_params=pltpu.CompilerParams(
            dimension_semantics=("parallel", "parallel", "arbitrary"),
            vmem_limit_bytes=_vmem_limit(cap)),
    )(x, gamma, beta, wT)


# ----------------------------------------------------------------------------
# Deterministic parameter init (shapes follow the PyTorch module's __init__)
# ----------------------------------------------------------------------------
def init_params(key, *, d_model, n_layer, vocab_size, d_state, d_conv,
                expand, gumbel_temp):
    d_inner = expand * d_model
    dt_rank = (d_model + 15) // 16
    keys = jax.random.split(key, 2 + n_layer)

    params = {
        "embedding": jax.random.normal(keys[0], (vocab_size, d_model),
                                       jnp.float32) * 0.02,
        "lm_head_wT": (jax.random.normal(keys[1], (d_model, vocab_size),
                                         jnp.float32)
                       * (d_model ** -0.5)).astype(jnp.bfloat16),
        "ln_gamma": jnp.ones((1, d_model), jnp.float32),
        "ln_beta": jnp.zeros((1, d_model), jnp.float32),
        "gumbel_temp": gumbel_temp,
        "dims": dict(d_state=d_state, d_conv=d_conv, dt_rank=dt_rank),
    }

    # Fused x_proj weight, zero-padded to a multiple of 128 output lanes so the
    # in-kernel matmul result is lane-dense.
    xp_width = _round_up(dt_rank + 2 * d_state, 128)

    layers = []
    for i in range(n_layer):
        lk = jax.random.split(keys[2 + i], 6)
        A = jnp.tile(jnp.arange(1, d_state + 1, dtype=jnp.float32)[None, :],
                     (d_inner, 1))
        A_log = jnp.log(A)                                    # (d_inner, d_state)
        in_w = jax.random.normal(lk[0], (d_model, 2 * d_inner),
                                 jnp.float32) * (d_model ** -0.5)
        xproj_core = jax.random.normal(lk[2], (d_inner, dt_rank + 2 * d_state),
                                       jnp.float32) * (d_inner ** -0.5)
        xproj_w = jnp.zeros((d_inner, xp_width), jnp.float32)
        xproj_w = xproj_w.at[:, :dt_rank + 2 * d_state].set(xproj_core)
        layers.append(dict(
            in_wx=in_w[:, :d_inner].astype(jnp.bfloat16),
            in_wz=in_w[:, d_inner:].astype(jnp.bfloat16),
            conv_w=jax.random.normal(lk[1], (d_conv, d_inner),
                                     jnp.float32) * (d_conv ** -0.5),
            conv_b=jnp.zeros((1, d_inner), jnp.float32),
            xproj_w=xproj_w.astype(jnp.bfloat16),
            dtproj_w=(jax.random.normal(lk[3], (dt_rank, d_inner), jnp.float32)
                      * (dt_rank ** -0.5)).astype(jnp.bfloat16),
            dtproj_b=jnp.full((1, d_inner), 0.5, jnp.float32),
            A_T=(-jnp.exp(A_log)).T,                          # (d_state, d_inner)
            D=jnp.ones((1, d_inner), jnp.float32),
            out_w=(jax.random.normal(lk[4], (d_inner, d_model), jnp.float32)
                   * (d_inner ** -0.5)).astype(jnp.bfloat16),
            z_logits=jax.random.normal(lk[5], (d_inner,), jnp.float32) * 0.5 + 1.0,
        ))
    params["layers"] = layers
    return params


# ----------------------------------------------------------------------------
# Full SDM_SSM forward:  (logits, all_masks, last_hidden_states)
# ----------------------------------------------------------------------------
def sdm_ssm_forward(params, input_ids, return_last_hidden_states=False):
    dims = params["dims"]
    x = jnp.take(params["embedding"], input_ids, axis=0)       # (B, L, d_model)
    x = x.astype(_RESIDUAL_DTYPE)                              # bf16 residual stream

    all_masks = []
    last_hidden = None
    n_layer = len(params["layers"])
    for i, lp in enumerate(params["layers"]):
        # TODO(synk): deterministic sigmoid mask used in place of stochastic
        # Gumbel-sigmoid sampling (no clean deterministic Pallas equivalent).
        mask = jax.nn.sigmoid(lp["z_logits"] / params["gumbel_temp"])
        # Pack the small per-channel vectors into one (4, d_inner) operand.
        vec = jnp.concatenate(
            [lp["conv_b"], lp["dtproj_b"], lp["D"], mask[None, :]], axis=0)
        want_y = (i == n_layer - 1) and return_last_hidden_states
        out = ssm_block(x, lp, vec, d_state=dims["d_state"],
                        d_conv=dims["d_conv"], dt_rank=dims["dt_rank"],
                        return_y=want_y)
        if want_y:
            x, last_hidden = out          # residual-fused output + layer output
        else:
            x = out                       # residual-fused output
        all_masks.append(mask)

    logits = norm_head(x, params["ln_gamma"], params["ln_beta"],
                       params["lm_head_wT"])
    return logits, all_masks, last_hidden


if __name__ == "__main__":
    # Small, forward-consistent shapes.
    d_model, n_layer, vocab_size = 32, 2, 64
    d_state, d_conv, expand = 8, 4, 2
    B, L = 2, 8

    key = jax.random.PRNGKey(0)
    pkey, ikey = jax.random.split(key)
    params = init_params(pkey, d_model=d_model, n_layer=n_layer,
                         vocab_size=vocab_size, d_state=d_state,
                         d_conv=d_conv, expand=expand, gumbel_temp=1.0)
    input_ids = jax.random.randint(ikey, (B, L), 0, vocab_size, dtype=jnp.int32)

    logits, all_masks, last_hidden = sdm_ssm_forward(
        params, input_ids, return_last_hidden_states=True)

    jax.block_until_ready(logits)
    jax.block_until_ready(all_masks)
    jax.block_until_ready(last_hidden)

    assert logits.shape == (B, L, vocab_size)
    assert len(all_masks) == n_layer
    assert last_hidden.shape == (B, L, d_model)
    print("KERNEL_OK")
</pallas_src>

<mosaic_0001>
module attributes {stable_mosaic.version = 11 : i64} {
  func.func @_probe(%arg0: i32, %arg1: memref<8x128xf32, #tpu.memory_space<vmem>>, %arg2: memref<8x128xf32, #tpu.memory_space<vmem>>) attributes {dimension_semantics = [#tpu.dimension_semantics<arbitrary>], iteration_bounds = array<i64: 1>, scalar_prefetch = 0 : i64, scratch_operands = 0 : i64, tpu.core_type = #tpu.core_type<tc>, window_params = [{pipeline_mode = #tpu.pipeline_mode<synchronous>, transform_indices = @transform_0, window_bounds = array<i64: 8, 128>}, {pipeline_mode = #tpu.pipeline_mode<synchronous>, transform_indices = @transform_1, window_bounds = array<i64: 8, 128>}]} {
    %c0 = arith.constant 0 : index
    %c0_0 = arith.constant 0 : index
    %0 = vector.load %arg1[%c0, %c0_0] : memref<8x128xf32, #tpu.memory_space<vmem>>, vector<8x128xf32>
    %cst = arith.constant 1.000000e+00 : f32
    %1 = vector.broadcast %cst : f32 to vector<8x128xf32>
    %2 = arith.addf %0, %1 : vector<8x128xf32>
    %c0_1 = arith.constant 0 : index
    %c0_2 = arith.constant 0 : index
    %3 = vector.load %arg2[%c0_1, %c0_2] : memref<8x128xf32, #tpu.memory_space<vmem>>, vector<8x128xf32>
    tpu.vector_store %arg2[%c0_1, %c0_2], %2 {strides = array<i32>} : memref<8x128xf32, #tpu.memory_space<vmem>>, vector<8x128xf32>,
    return
  }
  func.func @transform_0(%arg0: i32) -> (i32, i32) {
    %c0_i32 = arith.constant 0 : i32
    %c0_i32_0 = arith.constant 0 : i32
    %c0_i32_1 = arith.constant 0 : i32
    return %c0_i32, %c0_i32_0 : i32, i32
  }
  func.func @transform_1(%arg0: i32) -> (i32, i32) {
    %c0_i32 = arith.constant 0 : i32
    %c0_i32_0 = arith.constant 0 : i32
    %c0_i32_1 = arith.constant 0 : i32
    return %c0_i32, %c0_i32_0 : i32, i32
  }
}

module attributes {stable_mosaic.version = 11 : i64} {
  func.func @_ssm_block_kernel(%arg0: i32, %arg1: i32, %arg2: memref<1x8x32xbf16, #tpu.memory_space<vmem>>, %arg3: memref<32x64xbf16, #tpu.memory_space<vmem>>, %arg4: memref<32x64xbf16, #tpu.memory_space<vmem>>, %arg5: memref<4x64xf32, #tpu.memory_space<vmem>>, %arg6: memref<64x128xbf16, #tpu.memory_space<vmem>>, %arg7: memref<2x64xbf16, #tpu.memory_space<vmem>>, %arg8: memref<8x64xf32, #tpu.memory_space<vmem>>, %arg9: memref<4x64xf32, #tpu.memory_space<vmem>>, %arg10: memref<64x32xbf16, #tpu.memory_space<vmem>>, %arg11: memref<1x8x32xbf16, #tpu.memory_space<vmem>>, %arg12: memref<8x64xf32, #tpu.memory_space<vmem>>, %arg13: memref<8x64xf32, #tpu.memory_space<vmem>>, %arg14: memref<8x8xf32, #tpu.memory_space<vmem>>, %arg15: memref<8x8xf32, #tpu.memory_space<vmem>>, %arg16: memref<8x64xf32, #tpu.memory_space<vmem>>, %arg17: memref<8x64xf32, #tpu.memory_space<vmem>>, %arg18: memref<3x64xf32, #tpu.memory_space<vmem>>) attributes {dimension_semantics = [#tpu.dimension_semantics<parallel>, #tpu.dimension_semantics<arbitrary>], iteration_bounds = array<i64: 2, 1>, scalar_prefetch = 0 : i64, scratch_operands = 7 : i64, tpu.core_type = #tpu.core_type<tc>, window_params = [{transform_indices = @transform_0, window_bounds = array<i64: 1, 8, 32>}, {pipeline_mode = #tpu.pipeline_mode<synchronous>, transform_indices = @transform_1, window_bounds = array<i64: 32, 64>}, {pipeline_mode = #tpu.pipeline_mode<synchronous>, transform_indices = @transform_2, window_bounds = array<i64: 32, 64>}, {pipeline_mode = #tpu.pipeline_mode<synchronous>, transform_indices = @transform_3, window_bounds = array<i64: 4, 64>}, {pipeline_mode = #tpu.pipeline_mode<synchronous>, transform_indices = @transform_4, window_bounds = array<i64: 64, 128>}, {pipeline_mode = #tpu.pipeline_mode<synchronous>, transform_indices = @transform_5, window_bounds = array<i64: 2, 64>}, {pipeline_mode = #tpu.pipeline_mode<synchronous>, transform_indices = @transform_6, window_bounds = array<i64: 8, 64>}, {pipeline_mode = #tpu.pipeline_mode<synchronous>, transform_indices = @transform_7, window_bounds = array<i64: 4, 64>}, {pipeline_mode = #tpu.pipeline_mode<synchronous>, transform_indices = @transform_8, window_bounds = array<i64: 64, 32>}, {transform_indices = @transform_9, window_bounds = array<i64: 1, 8, 32>}]} {
    %c0_i32 = arith.constant 0 : i32
    %0 = arith.cmpi eq, %arg1, %c0_i32 : i32
    %1 = arith.extui %0 : i1 to i32
    %c0_i32_0 = arith.constant 0 : i32
    %2 = arith.cmpi ne, %1, %c0_i32_0 : i32
    scf.if %2 {
      %cst_76 = arith.constant 0.000000e+00 : f32
      %252 = vector.broadcast %cst_76 : f32 to vector<8x64xf32>
      %c0_77 = arith.constant 0 : index
      %c0_78 = arith.constant 0 : index
      %253 = vector.load %arg17[%c0_77, %c0_78] : memref<8x64xf32, #tpu.memory_space<vmem>>, vector<8x64xf32>
      tpu.vector_store %arg17[%c0_77, %c0_78], %252 {strides = array<i32>} : memref<8x64xf32, #tpu.memory_space<vmem>>, vector<8x64xf32>,
      %cst_79 = arith.constant 0.000000e+00 : f32
      %254 = vector.broadcast %cst_79 : f32 to vector<3x64xf32>
      %c0_80 = arith.constant 0 : index
      %c0_81 = arith.constant 0 : index
      %255 = vector.load %arg18[%c0_80, %c0_81] : memref<3x64xf32, #tpu.memory_space<vmem>>, vector<3x64xf32>
      tpu.vector_store %arg18[%c0_80, %c0_81], %254 {strides = array<i32>} : memref<3x64xf32, #tpu.memory_space<vmem>>, vector<3x64xf32>,
    } else {
    }
    %c0 = arith.constant 0 : index
    %c0_1 = arith.constant 0 : index
    %3 = vector.load %arg9[%c0, %c0_1] : memref<4x64xf32, #tpu.memory_space<vmem>>, vector<1x64xf32>
    %c1 = arith.constant 1 : index
    %c0_2 = arith.constant 0 : index
    %4 = vector.load %arg9[%c1, %c0_2] : memref<4x64xf32, #tpu.memory_space<vmem>>, vector<1x64xf32>
    %c2 = arith.constant 2 : index
    %c0_3 = arith.constant 0 : index
    %5 = vector.load %arg9[%c2, %c0_3] : memref<4x64xf32, #tpu.memory_space<vmem>>, vector<1x64xf32>
    %c3 = arith.constant 3 : index
    %c0_4 = arith.constant 0 : index
    %6 = vector.load %arg9[%c3, %c0_4] : memref<4x64xf32, #tpu.memory_space<vmem>>, vector<1x64xf32>
    %c0_5 = arith.constant 0 : index
    %c0_6 = arith.constant 0 : index
    %c0_7 = arith.constant 0 : index
    %7 = vector.load %arg2[%c0_5, %c0_6, %c0_7] : memref<1x8x32xbf16, #tpu.memory_space<vmem>>, vector<1x8x32xbf16>
    %8 = vector.shape_cast %7 : vector<1x8x32xbf16> to vector<8x32xbf16>
    %c0_8 = arith.constant 0 : index
    %c0_9 = arith.constant 0 : index
    %9 = vector.load %arg3[%c0_8, %c0_9] : memref<32x64xbf16, #tpu.memory_space<vmem>>, vector<32x64xbf16>
    %cst = arith.constant dense<0.000000e+00> : vector<8x64xf32>
    %10 = tpu.matmul %8, %9, %cst {dimension_numbers = #tpu.dot_dimension_numbers<[1], [0], [0], [1], [0, 0, 1, 1], [], []>} : vector<8x32xbf16>, vector<32x64xbf16>, vector<8x64xf32> -> vector<8x64xf32>
    %c0_10 = arith.constant 0 : index
    %c0_11 = arith.constant 0 : index
    %11 = vector.load %arg18[%c0_10, %c0_11] : memref<3x64xf32, #tpu.memory_space<vmem>>, vector<3x64xf32>
    %12 = tpu.concatenate %11, %10 in 0 : vector<3x64xf32>, vector<8x64xf32> -> vector<11x64xf32>
    %13 = vector.extract_strided_slice %10 {offsets = [5, 0], sizes = [3, 64], strides = [1, 1]} : vector<8x64xf32> to vector<3x64xf32>
    %c0_12 = arith.constant 0 : index
    %c0_13 = arith.constant 0 : index
    %14 = vector.load %arg18[%c0_12, %c0_13] : memref<3x64xf32, #tpu.memory_space<vmem>>, vector<3x64xf32>
    tpu.vector_store %arg18[%c0_12, %c0_13], %13 {strides = array<i32>} : memref<3x64xf32, #tpu.memory_space<vmem>>, vector<3x64xf32>,
    %15 = vector.extract_strided_slice %12 {offsets = [0, 0], sizes = [8, 64], strides = [1, 1]} : vector<11x64xf32> to vector<8x64xf32>
    %c0_14 = arith.constant 0 : index
    %c0_15 = arith.constant 0 : index
    %16 = vector.load %arg5[%c0_14, %c0_15] : memref<4x64xf32, #tpu.memory_space<vmem>>, vector<1x64xf32>
    %17 = vector.broadcast %16 : vector<1x64xf32> to vector<8x64xf32>
    %18 = arith.mulf %15, %17 : vector<8x64xf32>
    %19 = vector.extract_strided_slice %12 {offsets = [1, 0], sizes = [8, 64], strides = [1, 1]} : vector<11x64xf32> to vector<8x64xf32>
    %c1_16 = arith.constant 1 : index
    %c0_17 = arith.constant 0 : index
    %20 = vector.load %arg5[%c1_16, %c0_17] : memref<4x64xf32, #tpu.memory_space<vmem>>, vector<1x64xf32>
    %21 = vector.broadcast %20 : vector<1x64xf32> to vector<8x64xf32>
    %22 = arith.mulf %19, %21 : vector<8x64xf32>
    %23 = arith.addf %18, %22 : vector<8x64xf32>
    %24 = vector.extract_strided_slice %12 {offsets = [2, 0], sizes = [8, 64], strides = [1, 1]} : vector<11x64xf32> to vector<8x64xf32>
    %c2_18 = arith.constant 2 : index
    %c0_19 = arith.constant 0 : index
    %25 = vector.load %arg5[%c2_18, %c0_19] : memref<4x64xf32, #tpu.memory_space<vmem>>, vector<1x64xf32>
    %26 = vector.broadcast %25 : vector<1x64xf32> to vector<8x64xf32>
    %27 = arith.mulf %24, %26 : vector<8x64xf32>
    %28 = arith.addf %23, %27 : vector<8x64xf32>
    %29 = vector.extract_strided_slice %12 {offsets = [3, 0], sizes = [8, 64], strides = [1, 1]} : vector<11x64xf32> to vector<8x64xf32>
    %c3_20 = arith.constant 3 : index
    %c0_21 = arith.constant 0 : index
    %30 = vector.load %arg5[%c3_20, %c0_21] : memref<4x64xf32, #tpu.memory_space<vmem>>, vector<1x64xf32>
    %31 = vector.broadcast %30 : vector<1x64xf32> to vector<8x64xf32>
    %32 = arith.mulf %29, %31 : vector<8x64xf32>
    %33 = arith.addf %28, %32 : vector<8x64xf32>
    %34 = vector.broadcast %3 : vector<1x64xf32> to vector<8x64xf32>
    %35 = arith.addf %33, %34 : vector<8x64xf32>
    %36 = arith.negf %35 : vector<8x64xf32>
    %37 = math.exp %36 : vector<8x64xf32>
    %cst_22 = arith.constant 1.000000e+00 : f32
    %38 = vector.broadcast %cst_22 : f32 to vector<8x64xf32>
    %39 = arith.addf %38, %37 : vector<8x64xf32>
    %40 = arith.divf %38, %39 : vector<8x64xf32>
    %41 = arith.mulf %35, %40 : vector<8x64xf32>
    %42 = vector.broadcast %6 : vector<1x64xf32> to vector<8x64xf32>
    %43 = arith.mulf %41, %42 : vector<8x64xf32>
    %c0_23 = arith.constant 0 : index
    %c0_24 = arith.constant 0 : index
    %44 = vector.load %arg12[%c0_23, %c0_24] : memref<8x64xf32, #tpu.memory_space<vmem>>, vector<8x64xf32>
    tpu.vector_store %arg12[%c0_23, %c0_24], %43 {strides = array<i32>} : memref<8x64xf32, #tpu.memory_space<vmem>>, vector<8x64xf32>,
    %45 = arith.truncf %43 : vector<8x64xf32> to vector<8x64xbf16>
    %c0_25 = arith.constant 0 : index
    %c0_26 = arith.constant 0 : index
    %46 = vector.load %arg6[%c0_25, %c0_26] : memref<64x128xbf16, #tpu.memory_space<vmem>>, vector<64x128xbf16>
    %cst_27 = arith.constant dense<0.000000e+00> : vector<8x128xf32>
    %47 = tpu.matmul %45, %46, %cst_27 {dimension_numbers = #tpu.dot_dimension_numbers<[1], [0], [0], [1], [0, 0, 1, 1], [], []>} : vector<8x64xbf16>, vector<64x128xbf16>, vector<8x128xf32> -> vector<8x128xf32>
    %48 = vector.extract_strided_slice %47 {offsets = [0, 0], sizes = [8, 2], strides = [1, 1]} : vector<8x128xf32> to vector<8x2xf32>
    %49 = vector.extract_strided_slice %47 {offsets = [0, 2], sizes = [8, 8], strides = [1, 1]} : vector<8x128xf32> to vector<8x8xf32>
    %c0_28 = arith.constant 0 : index
    %c0_29 = arith.constant 0 : index
    %50 = vector.load %arg14[%c0_28, %c0_29] : memref<8x8xf32, #tpu.memory_space<vmem>>, vector<8x8xf32>
    tpu.vector_store %arg14[%c0_28, %c0_29], %49 {strides = array<i32>} : memref<8x8xf32, #tpu.memory_space<vmem>>, vector<8x8xf32>,
    %51 = vector.extract_strided_slice %47 {offsets = [0, 10], sizes = [8, 8], strides = [1, 1]} : vector<8x128xf32> to vector<8x8xf32>
    %c0_30 = arith.constant 0 : index
    %c0_31 = arith.constant 0 : index
    %52 = vector.load %arg15[%c0_30, %c0_31] : memref<8x8xf32, #tpu.memory_space<vmem>>, vector<8x8xf32>
    tpu.vector_store %arg15[%c0_30, %c0_31], %51 {strides = array<i32>} : memref<8x8xf32, #tpu.memory_space<vmem>>, vector<8x8xf32>,
    %53 = arith.truncf %48 : vector<8x2xf32> to vector<8x2xbf16>
    %c0_32 = arith.constant 0 : index
    %c0_33 = arith.constant 0 : index
    %54 = vector.load %arg7[%c0_32, %c0_33] : memref<2x64xbf16, #tpu.memory_space<vmem>>, vector<2x64xbf16>
    %cst_34 = arith.constant dense<0.000000e+00> : vector<8x64xf32>
    %55 = tpu.matmul %53, %54, %cst_34 {dimension_numbers = #tpu.dot_dimension_numbers<[1], [0], [0], [1], [0, 0, 1, 1], [], []>} : vector<8x2xbf16>, vector<2x64xbf16>, vector<8x64xf32> -> vector<8x64xf32>
    %56 = vector.broadcast %4 : vector<1x64xf32> to vector<8x64xf32>
    %57 = arith.addf %55, %56 : vector<8x64xf32>
    %cst_35 = arith.constant 0.000000e+00 : f32
    %58 = vector.broadcast %cst_35 : f32 to vector<8x64xf32>
    %59 = arith.maximumf %57, %58 : vector<8x64xf32>
    %60 = vector.broadcast %cst_35 : f32 to vector<8x64xf32>
    %61 = arith.subf %57, %60 : vector<8x64xf32>
    %62 = arith.cmpf one, %61, %61 : vector<8x64xf32>
    %63 = vector.broadcast %cst_35 : f32 to vector<8x64xf32>
    %64 = arith.addf %57, %63 : vector<8x64xf32>
    %65 = math.absf %61 : vector<8x64xf32>
    %cst_36 = arith.constant 0.000000e+00 : f32
    %66 = vector.broadcast %cst_36 : f32 to vector<8x64xf32>
    %67 = arith.subf %66, %65 : vector<8x64xf32>
    %68 = math.exp %67 : vector<8x64xf32>
    %69 = math.log1p %68 : vector<8x64xf32>
    %70 = arith.addf %59, %69 : vector<8x64xf32>
    %71 = arith.select %62, %64, %70 : vector<8x64xi1>, vector<8x64xf32>
    %c0_37 = arith.constant 0 : index
    %c0_38 = arith.constant 0 : index
    %72 = vector.load %arg13[%c0_37, %c0_38] : memref<8x64xf32, #tpu.memory_space<vmem>>, vector<8x64xf32>
    tpu.vector_store %arg13[%c0_37, %c0_38], %71 {strides = array<i32>} : memref<8x64xf32, #tpu.memory_space<vmem>>, vector<8x64xf32>,
    %c0_39 = arith.constant 0 : index
    %c0_40 = arith.constant 0 : index
    %73 = vector.load %arg8[%c0_39, %c0_40] : memref<8x64xf32, #tpu.memory_space<vmem>>, vector<8x64xf32>
    %c0_41 = arith.constant 0 : index
    %c0_42 = arith.constant 0 : index
    %74 = vector.load %arg17[%c0_41, %c0_42] : memref<8x64xf32, #tpu.memory_space<vmem>>, vector<8x64xf32>
    %c0_i32_43 = arith.constant 0 : i32
    %c8_i32 = arith.constant 8 : i32
    %75 = arith.muli %c0_i32_43, %c8_i32 : i32
    %76 = tpu.assume_multiple %75, 8 : i32
    %77 = arith.index_cast %76 : i32 to index
    %c0_44 = arith.constant 0 : index
    %78 = vector.load %arg13[%77, %c0_44] : memref<8x64xf32, #tpu.memory_space<vmem>>, vector<8x64xf32>
    %79 = arith.index_cast %76 : i32 to index
    %c0_45 = arith.constant 0 : index
    %80 = vector.load %arg12[%79, %c0_45] : memref<8x64xf32, #tpu.memory_space<vmem>>, vector<8x64xf32>
    %81 = arith.index_cast %76 : i32 to index
    %c0_46 = arith.constant 0 : index
    %82 = vector.load %arg14[%81, %c0_46] : memref<8x8xf32, #tpu.memory_space<vmem>>, vector<8x8xf32>
    %83 = tpu.transpose %82, [1, 0] : vector<8x8xf32> -> vector<8x8xf32>
    %84 = arith.index_cast %76 : i32 to index
    %c0_47 = arith.constant 0 : index
    %85 = vector.load %arg15[%84, %c0_47] : memref<8x8xf32, #tpu.memory_space<vmem>>, vector<8x8xf32>
    %86 = tpu.transpose %85, [1, 0] : vector<8x8xf32> -> vector<8x8xf32>
    %87 = vector.extract_strided_slice %78 {offsets = [0, 0], sizes = [1, 64], strides = [1, 1]} : vector<8x64xf32> to vector<1x64xf32>
    %88 = vector.broadcast %87 : vector<1x64xf32> to vector<8x64xf32>
    %89 = arith.mulf %88, %73 : vector<8x64xf32>
    %90 = math.exp %89 : vector<8x64xf32>
    %91 = vector.extract_strided_slice %83 {offsets = [0, 0], sizes = [8, 1], strides = [1, 1]} : vector<8x8xf32> to vector<8x1xf32>
    %92 = vector.extract_strided_slice %80 {offsets = [0, 0], sizes = [1, 64], strides = [1, 1]} : vector<8x64xf32> to vector<1x64xf32>
    %93 = arith.mulf %87, %92 : vector<1x64xf32>
    %94 = vector.broadcast %91 : vector<8x1xf32> to vector<8x64xf32>
    %95 = vector.broadcast %93 : vector<1x64xf32> to vector<8x64xf32>
    %96 = arith.mulf %94, %95 : vector<8x64xf32>
    %97 = arith.mulf %90, %74 : vector<8x64xf32>
    %98 = arith.addf %97, %96 : vector<8x64xf32>
    %99 = vector.extract_strided_slice %86 {offsets = [0, 0], sizes = [8, 1], strides = [1, 1]} : vector<8x8xf32> to vector<8x1xf32>
    %100 = vector.broadcast %99 : vector<8x1xf32> to vector<8x64xf32>
    %101 = arith.mulf %100, %98 : vector<8x64xf32>
    %cst_48 = arith.constant dense<0.000000e+00> : vector<64xf32>
    %102 = vector.multi_reduction <add>, %101, %cst_48 [0] : vector<8x64xf32> to vector<64xf32>
    %103 = vector.shape_cast %102 : vector<64xf32> to vector<1x64xf32>
    %104 = vector.extract_strided_slice %78 {offsets = [1, 0], sizes = [1, 64], strides = [1, 1]} : vector<8x64xf32> to vector<1x64xf32>
    %105 = vector.broadcast %104 : vector<1x64xf32> to vector<8x64xf32>
    %106 = arith.mulf %105, %73 : vector<8x64xf32>
    %107 = math.exp %106 : vector<8x64xf32>
    %108 = vector.extract_strided_slice %83 {offsets = [0, 1], sizes = [8, 1], strides = [1, 1]} : vector<8x8xf32> to vector<8x1xf32>
    %109 = vector.extract_strided_slice %80 {offsets = [1, 0], sizes = [1, 64], strides = [1, 1]} : vector<8x64xf32> to vector<1x64xf32>
    %110 = arith.mulf %104, %109 : vector<1x64xf32>
    %111 = vector.broadcast %108 : vector<8x1xf32> to vector<8x64xf32>
    %112 = vector.broadcast %110 : vector<1x64xf32> to vector<8x64xf32>
    %113 = arith.mulf %111, %112 : vector<8x64xf32>
    %114 = arith.mulf %107, %98 : vector<8x64xf32>
    %115 = arith.addf %114, %113 : vector<8x64xf32>
    %116 = vector.extract_strided_slice %86 {offsets = [0, 1], sizes = [8, 1], strides = [1, 1]} : vector<8x8xf32> to vector<8x1xf32>
    %117 = vector.broadcast %116 : vector<8x1xf32> to vector<8x64xf32>
    %118 = arith.mulf %117, %115 : vector<8x64xf32>
    %cst_49 = arith.constant dense<0.000000e+00> : vector<64xf32>
    %119 = vector.multi_reduction <add>, %118, %cst_49 [0] : vector<8x64xf32> to vector<64xf32>
    %120 = vector.shape_cast %119 : vector<64xf32> to vector<1x64xf32>
    %121 = vector.extract_strided_slice %78 {offsets = [2, 0], sizes = [1, 64], strides = [1, 1]} : vector<8x64xf32> to vector<1x64xf32>
    %122 = vector.broadcast %121 : vector<1x64xf32> to vector<8x64xf32>
    %123 = arith.mulf %122, %73 : vector<8x64xf32>
    %124 = math.exp %123 : vector<8x64xf32>
    %125 = vector.extract_strided_slice %83 {offsets = [0, 2], sizes = [8, 1], strides = [1, 1]} : vector<8x8xf32> to vector<8x1xf32>
    %126 = vector.extract_strided_slice %80 {offsets = [2, 0], sizes = [1, 64], strides = [1, 1]} : vector<8x64xf32> to vector<1x64xf32>
    %127 = arith.mulf %121, %126 : vector<1x64xf32>
    %128 = vector.broadcast %125 : vector<8x1xf32> to vector<8x64xf32>
    %129 = vector.broadcast %127 : vector<1x64xf32> to vector<8x64xf32>
    %130 = arith.mulf %128, %129 : vector<8x64xf32>
    %131 = arith.mulf %124, %115 : vector<8x64xf32>
    %132 = arith.addf %131, %130 : vector<8x64xf32>
    %133 = vector.extract_strided_slice %86 {offsets = [0, 2], sizes = [8, 1], strides = [1, 1]} : vector<8x8xf32> to vector<8x1xf32>
    %134 = vector.broadcast %133 : vector<8x1xf32> to vector<8x64xf32>
    %135 = arith.mulf %134, %132 : vector<8x64xf32>
    %cst_50 = arith.constant dense<0.000000e+00> : vector<64xf32>
    %136 = vector.multi_reduction <add>, %135, %cst_50 [0] : vector<8x64xf32> to vector<64xf32>
    %137 = vector.shape_cast %136 : vector<64xf32> to vector<1x64xf32>
    %138 = vector.extract_strided_slice %78 {offsets = [3, 0], sizes = [1, 64], strides = [1, 1]} : vector<8x64xf32> to vector<1x64xf32>
    %139 = vector.broadcast %138 : vector<1x64xf32> to vector<8x64xf32>
    %140 = arith.mulf %139, %73 : vector<8x64xf32>
    %141 = math.exp %140 : vector<8x64xf32>
    %142 = vector.extract_strided_slice %83 {offsets = [0, 3], sizes = [8, 1], strides = [1, 1]} : vector<8x8xf32> to vector<8x1xf32>
    %143 = vector.extract_strided_slice %80 {offsets = [3, 0], sizes = [1, 64], strides = [1, 1]} : vector<8x64xf32> to vector<1x64xf32>
    %144 = arith.mulf %138, %143 : vector<1x64xf32>
    %145 = vector.broadcast %142 : vector<8x1xf32> to vector<8x64xf32>
    %146 = vector.broadcast %144 : vector<1x64xf32> to vector<8x64xf32>
    %147 = arith.mulf %145, %146 : vector<8x64xf32>
    %148 = arith.mulf %141, %132 : vector<8x64xf32>
    %149 = arith.addf %148, %147 : vector<8x64xf32>
    %150 = vector.extract_strided_slice %86 {offsets = [0, 3], sizes = [8, 1], strides = [1, 1]} : vector<8x8xf32> to vector<8x1xf32>
    %151 = vector.broadcast %150 : vector<8x1xf32> to vector<8x64xf32>
    %152 = arith.mulf %151, %149 : vector<8x64xf32>
    %cst_51 = arith.constant dense<0.000000e+00> : vector<64xf32>
    %153 = vector.multi_reduction <add>, %152, %cst_51 [0] : vector<8x64xf32> to vector<64xf32>
    %154 = vector.shape_cast %153 : vector<64xf32> to vector<1x64xf32>
    %155 = vector.extract_strided_slice %78 {offsets = [4, 0], sizes = [1, 64], strides = [1, 1]} : vector<8x64xf32> to vector<1x64xf32>
    %156 = vector.broadcast %155 : vector<1x64xf32> to vector<8x64xf32>
    %157 = arith.mulf %156, %73 : vector<8x64xf32>
    %158 = math.exp %157 : vector<8x64xf32>
    %159 = vector.extract_strided_slice %83 {offsets = [0, 4], sizes = [8, 1], strides = [1, 1]} : vector<8x8xf32> to vector<8x1xf32>
    %160 = vector.extract_strided_slice %80 {offsets = [4, 0], sizes = [1, 64], strides = [1, 1]} : vector<8x64xf32> to vector<1x64xf32>
    %161 = arith.mulf %155, %160 : vector<1x64xf32>
    %162 = vector.broadcast %159 : vector<8x1xf32> to vector<8x64xf32>
    %163 = vector.broadcast %161 : vector<1x64xf32> to vector<8x64xf32>
    %164 = arith.mulf %162, %163 : vector<8x64xf32>
    %165 = arith.mulf %158, %149 : vector<8x64xf32>
    %166 = arith.addf %165, %164 : vector<8x64xf32>
    %167 = vector.extract_strided_slice %86 {offsets = [0, 4], sizes = [8, 1], strides = [1, 1]} : vector<8x8xf32> to vector<8x1xf32>
    %168 = vector.broadcast %167 : vector<8x1xf32> to vector<8x64xf32>
    %169 = arith.mulf %168, %166 : vector<8x64xf32>
    %cst_52 = arith.constant dense<0.000000e+00> : vector<64xf32>
    %170 = vector.multi_reduction <add>, %169, %cst_52 [0] : vector<8x64xf32> to vector<64xf32>
    %171 = vector.shape_cast %170 : vector<64xf32> to vector<1x64xf32>
    %172 = vector.extract_strided_slice %78 {offsets = [5, 0], sizes = [1, 64], strides = [1, 1]} : vector<8x64xf32> to vector<1x64xf32>
    %173 = vector.broadcast %172 : vector<1x64xf32> to vector<8x64xf32>
    %174 = arith.mulf %173, %73 : vector<8x64xf32>
    %175 = math.exp %174 : vector<8x64xf32>
    %176 = vector.extract_strided_slice %83 {offsets = [0, 5], sizes = [8, 1], strides = [1, 1]} : vector<8x8xf32> to vector<8x1xf32>
    %177 = vector.extract_strided_slice %80 {offsets = [5, 0], sizes = [1, 64], strides = [1, 1]} : vector<8x64xf32> to vector<1x64xf32>
    %178 = arith.mulf %172, %177 : vector<1x64xf32>
    %179 = vector.broadcast %176 : vector<8x1xf32> to vector<8x64xf32>
    %180 = vector.broadcast %178 : vector<1x64xf32> to vector<8x64xf32>
    %181 = arith.mulf %179, %180 : vector<8x64xf32>
    %182 = arith.mulf %175, %166 : vector<8x64xf32>
    %183 = arith.addf %182, %181 : vector<8x64xf32>
    %184 = vector.extract_strided_slice %86 {offsets = [0, 5], sizes = [8, 1], strides = [1, 1]} : vector<8x8xf32> to vector<8x1xf32>
    %185 = vector.broadcast %184 : vector<8x1xf32> to vector<8x64xf32>
    %186 = arith.mulf %185, %183 : vector<8x64xf32>
    %cst_53 = arith.constant dense<0.000000e+00> : vector<64xf32>
    %187 = vector.multi_reduction <add>, %186, %cst_53 [0] : vector<8x64xf32> to vector<64xf32>
    %188 = vector.shape_cast %187 : vector<64xf32> to vector<1x64xf32>
    %189 = vector.extract_strided_slice %78 {offsets = [6, 0], sizes = [1, 64], strides = [1, 1]} : vector<8x64xf32> to vector<1x64xf32>
    %190 = vector.broadcast %189 : vector<1x64xf32> to vector<8x64xf32>
    %191 = arith.mulf %190, %73 : vector<8x64xf32>
    %192 = math.exp %191 : vector<8x64xf32>
    %193 = vector.extract_strided_slice %83 {offsets = [0, 6], sizes = [8, 1], strides = [1, 1]} : vector<8x8xf32> to vector<8x1xf32>
    %194 = vector.extract_strided_slice %80 {offsets = [6, 0], sizes = [1, 64], strides = [1, 1]} : vector<8x64xf32> to vector<1x64xf32>
    %195 = arith.mulf %189, %194 : vector<1x64xf32>
    %196 = vector.broadcast %193 : vector<8x1xf32> to vector<8x64xf32>
    %197 = vector.broadcast %195 : vector<1x64xf32> to vector<8x64xf32>
    %198 = arith.mulf %196, %197 : vector<8x64xf32>
    %199 = arith.mulf %192, %183 : vector<8x64xf32>
    %200 = arith.addf %199, %198 : vector<8x64xf32>
    %201 = vector.extract_strided_slice %86 {offsets = [0, 6], sizes = [8, 1], strides = [1, 1]} : vector<8x8xf32> to vector<8x1xf32>
    %202 = vector.broadcast %201 : vector<8x1xf32> to vector<8x64xf32>
    %203 = arith.mulf %202, %200 : vector<8x64xf32>
    %cst_54 = arith.constant dense<0.000000e+00> : vector<64xf32>
    %204 = vector.multi_reduction <add>, %203, %cst_54 [0] : vector<8x64xf32> to vector<64xf32>
    %205 = vector.shape_cast %204 : vector<64xf32> to vector<1x64xf32>
    %206 = vector.extract_strided_slice %78 {offsets = [7, 0], sizes = [1, 64], strides = [1, 1]} : vector<8x64xf32> to vector<1x64xf32>
    %207 = vector.broadcast %206 : vector<1x64xf32> to vector<8x64xf32>
    %208 = arith.mulf %207, %73 : vector<8x64xf32>
    %209 = math.exp %208 : vector<8x64xf32>
    %210 = vector.extract_strided_slice %83 {offsets = [0, 7], sizes = [8, 1], strides = [1, 1]} : vector<8x8xf32> to vector<8x1xf32>
    %211 = vector.extract_strided_slice %80 {offsets = [7, 0], sizes = [1, 64], strides = [1, 1]} : vector<8x64xf32> to vector<1x64xf32>
    %212 = arith.mulf %206, %211 : vector<1x64xf32>
    %213 = vector.broadcast %210 : vector<8x1xf32> to vector<8x64xf32>
    %214 = vector.broadcast %212 : vector<1x64xf32> to vector<8x64xf32>
    %215 = arith.mulf %213, %214 : vector<8x64xf32>
    %216 = arith.mulf %209, %200 : vector<8x64xf32>
    %217 = arith.addf %216, %215 : vector<8x64xf32>
    %218 = vector.extract_strided_slice %86 {offsets = [0, 7], sizes = [8, 1], strides = [1, 1]} : vector<8x8xf32> to vector<8x1xf32>
    %219 = vector.broadcast %218 : vector<8x1xf32> to vector<8x64xf32>
    %220 = arith.mulf %219, %217 : vector<8x64xf32>
    %cst_55 = arith.constant dense<0.000000e+00> : vector<64xf32>
    %221 = vector.multi_reduction <add>, %220, %cst_55 [0] : vector<8x64xf32> to vector<64xf32>
    %222 = vector.shape_cast %221 : vector<64xf32> to vector<1x64xf32>
    %223 = tpu.concatenate %103, %120, %137, %154, %171, %188, %205, %222 in 0 : vector<1x64xf32>, vector<1x64xf32>, vector<1x64xf32>, vector<1x64xf32>, vector<1x64xf32>, vector<1x64xf32>, vector<1x64xf32>, vector<1x64xf32> -> vector<8x64xf32>
    %224 = arith.index_cast %76 : i32 to index
    %c0_56 = arith.constant 0 : index
    %225 = vector.load %arg16[%224, %c0_56] : memref<8x64xf32, #tpu.memory_space<vmem>>, vector<8x64xf32>
    tpu.vector_store %arg16[%224, %c0_56], %223 {strides = array<i32>} : memref<8x64xf32, #tpu.memory_space<vmem>>, vector<8x64xf32>,
    %c1_i32 = arith.constant 1 : i32
    %c0_57 = arith.constant 0 : index
    %c0_58 = arith.constant 0 : index
    %226 = vector.load %arg17[%c0_57, %c0_58] : memref<8x64xf32, #tpu.memory_space<vmem>>, vector<8x64xf32>
    tpu.vector_store %arg17[%c0_57, %c0_58], %217 {strides = array<i32>} : memref<8x64xf32, #tpu.memory_space<vmem>>, vector<8x64xf32>,
    %c0_59 = arith.constant 0 : index
    %c0_60 = arith.constant 0 : index
    %227 = vector.load %arg4[%c0_59, %c0_60] : memref<32x64xbf16, #tpu.memory_space<vmem>>, vector<32x64xbf16>
    %cst_61 = arith.constant dense<0.000000e+00> : vector<8x64xf32>
    %228 = tpu.matmul %8, %227, %cst_61 {dimension_numbers = #tpu.dot_dimension_numbers<[1], [0], [0], [1], [0, 0, 1, 1], [], []>} : vector<8x32xbf16>, vector<32x64xbf16>, vector<8x64xf32> -> vector<8x64xf32>
    %c0_62 = arith.constant 0 : index
    %c0_63 = arith.constant 0 : index
    %229 = vector.load %arg16[%c0_62, %c0_63] : memref<8x64xf32, #tpu.memory_space<vmem>>, vector<8x64xf32>
    %c0_64 = arith.constant 0 : index
    %c0_65 = arith.constant 0 : index
    %230 = vector.load %arg12[%c0_64, %c0_65] : memref<8x64xf32, #tpu.memory_space<vmem>>, vector<8x64xf32>
    %231 = vector.broadcast %5 : vector<1x64xf32> to vector<8x64xf32>
    %232 = arith.mulf %230, %231 : vector<8x64xf32>
    %233 = arith.addf %229, %232 : vector<8x64xf32>
    %234 = arith.negf %228 : vector<8x64xf32>
    %235 = math.exp %234 : vector<8x64xf32>
    %cst_66 = arith.constant 1.000000e+00 : f32
    %236 = vector.broadcast %cst_66 : f32 to vector<8x64xf32>
    %237 = arith.addf %236, %235 : vector<8x64xf32>
    %238 = arith.divf %236, %237 : vector<8x64xf32>
    %239 = arith.mulf %228, %238 : vector<8x64xf32>
    %240 = arith.mulf %233, %239 : vector<8x64xf32>
    %241 = arith.truncf %240 : vector<8x64xf32> to vector<8x64xbf16>
    %c0_67 = arith.constant 0 : index
    %c0_68 = arith.constant 0 : index
    %242 = vector.load %arg10[%c0_67, %c0_68] : memref<64x32xbf16, #tpu.memory_space<vmem>>, vector<64x32xbf16>
    %cst_69 = arith.constant dense<0.000000e+00> : vector<8x32xf32>
    %243 = tpu.matmul %241, %242, %cst_69 {dimension_numbers = #tpu.dot_dimension_numbers<[1], [0], [0], [1], [0, 0, 1, 1], [], []>} : vector<8x64xbf16>, vector<64x32xbf16>, vector<8x32xf32> -> vector<8x32xf32>
    %c0_70 = arith.constant 0 : index
    %c0_71 = arith.constant 0 : index
    %c0_72 = arith.constant 0 : index
    %244 = vector.load %arg2[%c0_70, %c0_71, %c0_72] : memref<1x8x32xbf16, #tpu.memory_space<vmem>>, vector<1x8x32xbf16>
    %245 = vector.shape_cast %244 : vector<1x8x32xbf16> to vector<8x32xbf16>
    %246 = arith.extf %245 : vector<8x32xbf16> to vector<8x32xf32>
    %247 = arith.addf %246, %243 : vector<8x32xf32>
    %248 = arith.truncf %247 : vector<8x32xf32> to vector<8x32xbf16>
    %c0_73 = arith.constant 0 : index
    %c0_74 = arith.constant 0 : index
    %c0_75 = arith.constant 0 : index
    %249 = vector.load %arg11[%c0_73, %c0_74, %c0_75] : memref<1x8x32xbf16, #tpu.memory_space<vmem>>, vector<1x8x32xbf16>
    %250 = vector.shape_cast %249 : vector<1x8x32xbf16> to vector<8x32xbf16>
    %251 = vector.shape_cast %248 : vector<8x32xbf16> to vector<1x8x32xbf16>
    tpu.vector_store %arg11[%c0_73, %c0_74, %c0_75], %251 {strides = array<i32>} : memref<1x8x32xbf16, #tpu.memory_space<vmem>>, vector<1x8x32xbf16>,
    return
  }
  func.func @transform_0(%arg0: i32, %arg1: i32) -> (i32, i32, i32) {
    %c0_i32 = arith.constant 0 : i32
    %c0_i32_0 = arith.constant 0 : i32
    return %arg0, %arg1, %c0_i32 : i32, i32, i32
  }
  func.func @transform_1(%arg0: i32, %arg1: i32) -> (i32, i32) {
    %c0_i32 = arith.constant 0 : i32
    %c0_i32_0 = arith.constant 0 : i32
    %c0_i32_1 = arith.constant 0 : i32
    return %c0_i32, %c0_i32_0 : i32, i32
  }
  func.func @transform_2(%arg0: i32, %arg1: i32) -> (i32, i32) {
    %c0_i32 = arith.constant 0 : i32
    %c0_i32_0 = arith.constant 0 : i32
    %c0_i32_1 = arith.constant 0 : i32
    return %c0_i32, %c0_i32_0 : i32, i32
  }
  func.func @transform_3(%arg0: i32, %arg1: i32) -> (i32, i32) {
    %c0_i32 = arith.constant 0 : i32
    %c0_i32_0 = arith.constant 0 : i32
    %c0_i32_1 = arith.constant 0 : i32
    return %c0_i32, %c0_i32_0 : i32, i32
  }
  func.func @transform_4(%arg0: i32, %arg1: i32) -> (i32, i32) {
    %c0_i32 = arith.constant 0 : i32
    %c0_i32_0 = arith.constant 0 : i32
    %c0_i32_1 = arith.constant 0 : i32
    return %c0_i32, %c0_i32_0 : i32, i32
  }
  func.func @transform_5(%arg0: i32, %arg1: i32) -> (i32, i32) {
    %c0_i32 = arith.constant 0 : i32
    %c0_i32_0 = arith.constant 0 : i32
    %c0_i32_1 = arith.constant 0 : i32
    return %c0_i32, %c0_i32_0 : i32, i32
  }
  func.func @transform_6(%arg0: i32, %arg1: i32) -> (i32, i32) {
    %c0_i32 = arith.constant 0 : i32
    %c0_i32_0 = arith.constant 0 : i32
    %c0_i32_1 = arith.constant 0 : i32
    return %c0_i32, %c0_i32_0 : i32, i32
  }
  func.func @transform_7(%arg0: i32, %arg1: i32) -> (i32, i32) {
    %c0_i32 = arith.constant 0 : i32
    %c0_i32_0 = arith.constant 0 : i32
    %c0_i32_1 = arith.constant 0 : i32
    return %c0_i32, %c0_i32_0 : i32, i32
  }
  func.func @transform_8(%arg0: i32, %arg1: i32) -> (i32, i32) {
    %c0_i32 = arith.constant 0 : i32
    %c0_i32_0 = arith.constant 0 : i32
    %c0_i32_1 = arith.constant 0 : i32
    return %c0_i32, %c0_i32_0 : i32, i32
  }
  func.func @transform_9(%arg0: i32, %arg1: i32) -> (i32, i32, i32) {
    %c0_i32 = arith.constant 0 : i32
    %c0_i32_0 = arith.constant 0 : i32
    return %arg0, %arg1, %c0_i32 : i32, i32, i32
  }
}

</mosaic_0001>

<llo_original>
// kernel: tpu_custom_call.1
$region0: #{tpu_custom_call.1}
  #allocation0 [shape = 'u32[]', space=smem, size = 0x4, offset = 0x4, fixed_abs, tag = 'smem constant byte address 0x4 - core index']
  #allocation1 [shape = 'u32[144,128]{1,0:T(1,128)}', space=vmem, size = 0x12000, scoped, tag = 'internal scratch']
  %s0 = inlined_call_operand.hbm [shape: f32[8,128], index: 0, kind: input, shape index: {}]
  %s1 = inlined_call_operand.hbm [shape: f32[8,128], index: 1, kind: output, shape index: {}]
  %s2 = sld [smem:[#allocation0]]
  $region18: #{tpu_custom_call.1} parent=0
    _
  %s4 = ssub.s32 1, %s2
  %s5 = scalar_select 0, %s4, %s2
  $region1: #{tpu_custom_call.1} parent=0
    #allocation2 [shape = 'u8[4096]{0}', space=vmem, size = 0x1000, scoped, tag = 'input window, operand 0, single buffered']
    #allocation3 [shape = 's32[1]{0}', space=sflag, size = 0x4, scoped, tag = 'scoped memory for tpu_custom_call.1']
    #allocation4 [shape = 's32[1]{0}', space=sflag, size = 0x4, scoped, tag = 'scoped memory for tpu_custom_call.1']
    #allocation5 [shape = 'u8[4096]{0}', space=vmem, size = 0x1000, scoped, tag = 'output window, operand 0, single buffered']
    %6 = vsyncpa [#allocation3], 0
    %7 = vsyncpa [#allocation4], 0
    // Predicated region
    $region2: #{tpu_custom_call.1} parent=1 // pred_check
      _
    $region3: #{tpu_custom_call.1} parent=1 // pred_check_branch
      %9 = sbr.rel (0) target = $region5
    $region4: #{tpu_custom_call.1} parent=1 // pred_region
      %s11 = ssub.s32 128, 128
      %12 = vsyncadd [#allocation3], %s11
      %s14 = sshll.u32 [#allocation2], 4
      %s15 = int_to_ptr.vmem [resolvable:$true] %s14
      %17 = dma.hbm_to_vmem [thread:$0]  %s0, 128, %s15, [#allocation3]
    $region5: #{tpu_custom_call.1} parent=1 // pred_fallthru
      _
    // Predicated region
    $region6: #{tpu_custom_call.1} parent=1 // pred_check
      _
    $region7: #{tpu_custom_call.1} parent=1 // pred_check_branch
      %19 = sbr.rel (0) target = $region9
    $region8: #{tpu_custom_call.1} parent=1 // pred_region
      %20 = dma.done [#allocation3], 128
    $region9: #{tpu_custom_call.1} parent=1 // pred_fallthru
      _
    %v21 = vld [vmem:[#allocation2] sm:$0xff]
    %v22 = vadd.f32 %v21, 1.0
    %23 = vst [vmem:[#allocation5] sm:$0xff] %v22
    // Predicated region
    $region10: #{tpu_custom_call.1} parent=1 // pred_check
      _
    $region11: #{tpu_custom_call.1} parent=1 // pred_check_branch
      %25 = sbr.rel (0) target = $region13
    $region12: #{tpu_custom_call.1} parent=1 // pred_region
      %s27 = ssub.s32 128, 128
      %28 = vsyncadd [#allocation4], %s27
      %s30 = sshll.u32 [#allocation5], 4
      %s31 = int_to_ptr.vmem [resolvable:$true] %s30
      %33 = dma.vmem_to_hbm [thread:$0]  %s31, 128, %s1, [#allocation4]
    $region13: #{tpu_custom_call.1} parent=1 // pred_fallthru
      _
    // Predicated region
    $region14: #{tpu_custom_call.1} parent=1 // pred_check
      _
    $region15: #{tpu_custom_call.1} parent=1 // pred_check_branch
      %35 = sbr.rel (0) target = $region17
    $region16: #{tpu_custom_call.1} parent=1 // pred_region
      %36 = dma.done [#allocation4], 128
    $region17: #{tpu_custom_call.1} parent=1 // pred_fallthru
      _
    %37 = vsyncpa [#allocation3], 1
    %38 = vsyncpa [#allocation4], 1

// kernel: tpu_custom_call.1
$region0: #{tpu_custom_call.1}
  #allocation0 [shape = 'u32[]', space=smem, size = 0x4, offset = 0x4, fixed_abs, tag = 'smem constant byte address 0x4 - core index']
  #allocation1 [shape = 'u32[144,128]{1,0:T(1,128)}', space=vmem, size = 0x12000, scoped, tag = 'internal scratch']
  #allocation2 [shape = 'f32[8,64]{1,0:T(8,128)}', space=vmem, size = 0x1000, scoped, tag = 'scratch operand']
  #allocation3 [shape = 'f32[8,64]{1,0:T(8,128)}', space=vmem, size = 0x1000, scoped, tag = 'scratch operand']
  #allocation4 [shape = 'f32[8,8]{1,0:T(8,128)}', space=vmem, size = 0x1000, scoped, tag = 'scratch operand']
  #allocation5 [shape = 'f32[8,8]{1,0:T(8,128)}', space=vmem, size = 0x1000, scoped, tag = 'scratch operand']
  #allocation6 [shape = 'f32[8,64]{1,0:T(8,128)}', space=vmem, size = 0x1000, scoped, tag = 'scratch operand']
  #allocation7 [shape = 'f32[8,64]{1,0:T(8,128)}', space=vmem, size = 0x1000, scoped, tag = 'scratch operand']
  #allocation8 [shape = 'f32[3,64]{1,0:T(4,128)}', space=vmem, size = 0x800, scoped, tag = 'scratch operand']
  %s0 = inlined_call_operand.hbm [shape: bf16[2,8,32], index: 0, kind: input, shape index: {}]
  %s1 = inlined_call_operand.hbm [shape: bf16[32,64], index: 1, kind: input, shape index: {}]
  %s2 = inlined_call_operand.hbm [shape: bf16[32,64], index: 2, kind: input, shape index: {}]
  %s3 = inlined_call_operand.hbm [shape: f32[4,64], index: 3, kind: input, shape index: {}]
  %s4 = inlined_call_operand.hbm [shape: bf16[64,128], index: 4, kind: input, shape index: {}]
  %s5 = inlined_call_operand.hbm [shape: bf16[2,64], index: 5, kind: input, shape index: {}]
  %s6 = inlined_call_operand.hbm [shape: f32[8,64], index: 6, kind: input, shape index: {}]
  %s7 = inlined_call_operand.hbm [shape: f32[4,64], index: 7, kind: input, shape index: {}]
  %s8 = inlined_call_operand.hbm [shape: bf16[64,32], index: 8, kind: input, shape index: {}]
  %s9 = inlined_call_operand.hbm [shape: bf16[2,8,32], index: 9, kind: output, shape index: {}]
  %s10 = sld [smem:[#allocation0]]
  $region109: #{tpu_custom_call.1} parent=0
    _
  %s12 = ssub.s32 1, %s10
  %s13 = scalar_select 0, %s12, %s10
  $region1: #{tpu_custom_call.1} parent=0
    #allocation9 [shape = 'u8[4096]{0}', space=vmem, size = 0x1000, scoped, tag = 'input window, operand 0']
    #allocation10 [shape = 's32[2]{0}', space=sflag, size = 0x8, scoped, tag = 'scoped memory for tpu_custom_call.1']
    #allocation11 [shape = 's32[2]{0}', space=sflag, size = 0x8, scoped, tag = 'scoped memory for tpu_custom_call.1']
    #allocation12 [shape = 'u8[8192]{0}', space=vmem, size = 0x2000, scoped, tag = 'input window, operand 1, single buffered']
    #allocation13 [shape = 's32[1]{0}', space=sflag, size = 0x4, scoped, tag = 'scoped memory for tpu_custom_call.1']
    #allocation14 [shape = 'u8[8192]{0}', space=vmem, size = 0x2000, scoped, tag = 'input window, operand 2, single buffered']
    #allocation15 [shape = 'u8[2048]{0}', space=vmem, size = 0x800, scoped, tag = 'input window, operand 3, single buffered']
    #allocation16 [shape = 's32[1]{0}', space=sflag, size = 0x4, scoped, tag = 'scoped memory for tpu_custom_call.1']
    #allocation17 [shape = 'u8[16384]{0}', space=vmem, size = 0x4000, scoped, tag = 'input window, operand 4, single buffered']
    #allocation18 [shape = 'u8[512]{0}', space=vmem, size = 0x400, scoped, tag = 'input window, operand 5, single buffered']
    #allocation19 [shape = 's32[1]{0}', space=sflag, size = 0x4, scoped, tag = 'scoped memory for tpu_custom_call.1']
    #allocation20 [shape = 'u8[4096]{0}', space=vmem, size = 0x1000, scoped, tag = 'input window, operand 6, single buffered']
    #allocation21 [shape = 'u8[2048]{0}', space=vmem, size = 0x800, scoped, tag = 'input window, operand 7, single buffered']
    #allocation22 [shape = 's32[1]{0}', space=sflag, size = 0x4, scoped, tag = 'scoped memory for tpu_custom_call.1']
    #allocation23 [shape = 'u8[16384]{0}', space=vmem, size = 0x4000, scoped, tag = 'input window, operand 8, single buffered']
    #allocation24 [shape = 'u8[4096]{0}', space=vmem, size = 0x1000, scoped, tag = 'output window, operand 0']
    %14 = vsyncpa [#allocation10], 0
    %s15 = scalar_lea.sflag [#allocation10], 1
    %16 = vsyncpa %s15, 0
    %17 = vsyncpa [#allocation13], 0
    %18 = vsyncpa [#allocation16], 0
    %19 = vsyncpa [#allocation19], 0
    %20 = vsyncpa [#allocation22], 0
    %21 = vsyncpa [#allocation11], 0
    %s22 = scalar_lea.sflag [#allocation11], 1
    %23 = vsyncpa %s22, 0
    loop: start=0, step=1, limit=4
    $region2: #{tpu_custom_call.1} parent=1 // loop_pre_header
      _
    $region3: #{tpu_custom_call.1} parent=1 // loop_header
      %s25 = sphi 0, %s29
      %p26 = scmp.ge.s32.totalorder %s25, 4
      %s32 = sphi 0, %s44
      %s33 = sphi 0, %s40
      %s34 = sphi 0, %s32
      %s35 = sphi 0, %s33
      %s36 = sphi 0, %s34
      %s37 = sphi 0, %s35
      %s49 = sphi 0, %s51
      %s52 = sphi 0, %s49
      %s53 = sphi 0, %s52
      %s69 = sphi 0, %s53
      %s73 = sphi 0, %s73
      %s75 = sphi 0, %s73
      %s76 = sphi 0, %s75
      %s90 = sphi 0, %s76
      %s94 = sphi 0, %s94
      %s96 = sphi 0, %s94
      %s97 = sphi 0, %s96
      %s111 = sphi 0, %s97
      %s115 = sphi 0, %s115
      %s117 = sphi 0, %s115
      %s118 = sphi 0, %s117
      %s132 = sphi 0, %s118
      %s136 = sphi 0, %s136
      %s138 = sphi 0, %s136
      %s139 = sphi 0, %s138
      %s153 = sphi 0, %s139
      %s157 = sphi 0, %s157
      %s159 = sphi 0, %s157
      %s160 = sphi 0, %s159
      %s174 = sphi 0, %s160
      %s178 = sphi 0, %s178
      %s180 = sphi 0, %s178
      %s181 = sphi 0, %s180
      %s195 = sphi 0, %s181
      %s199 = sphi 0, %s199
      %s201 = sphi 0, %s199
      %s202 = sphi 0, %s201
      %s216 = sphi 0, %s202
      %s220 = sphi 0, %s220
      %s222 = sphi 0, %s220
      %s223 = sphi 0, %s222
      %s237 = sphi 0, %s223
      %s245 = sphi 0, %s247
      %s248 = sphi 0, %s245
      %s249 = sphi 0, %s248
      %s265 = sphi 0, %s249
    $region4: #{tpu_custom_call.1} parent=1 // loop_header_branch
      %28 = sbr.rel (%p26) target = $region8
    $region5: #{tpu_custom_call.1} parent=1 // loop_body
      %s30 = ssub.s32 %s25, 1
      %s31 = ssub.s32 %s25, 2
      %s38 = sadd.s32 1, %s33
      %p39 = scmp.ge.s32.totalorder %s38, 1
      %s40 = scalar_select %p39, 0, %s38
      %s41 = sadd.s32 1, %s32
      %s42 = scalar_select %p39, %s41, %s32
      %p43 = scmp.ge.s32.totalorder %s42, 2
      %s44 = scalar_select %p43, 0, %s42
      %s45 = ssub.s32 %s32, %s44
      %s46 = ssub.s32 %s33, %s40
      %s47 = sor.u32 %s45, %s46
      %p48 = scmp.eq.s32.totalorder %s47, 0
      %s50 = sadd.s32 %s49, 1
      %s51 = scalar_select %p48, %s49, %s50
      %p54 = pneg %p48
      %p55 = scmp.eq.s32.totalorder %s25, 1
      %p56 = por %p54, %p55
      %p57 = scmp.ne.s32.totalorder %s49, %s52
      %p58 = scmp.eq.s32.totalorder %s25, 0
      %p59 = por %p57, %p58
      %p60 = scmp.ne.s32.totalorder %s49, %s52
      %p61 = scmp.eq.s32.totalorder %s30, 1
      %p62 = por %p60, %p61
      %p63 = scmp.ne.s32.totalorder %s52, %s53
      %p64 = scmp.eq.s32.totalorder %s30, 0
      %p65 = por %p63, %p64
      %p66 = scmp.ne.s32.totalorder %s52, %s53
      %p67 = scmp.eq.s32.totalorder %s31, 1
      %p68 = por %p66, %p67
      %p70 = scmp.ne.s32.totalorder %s53, %s69
      %p71 = scmp.eq.s32.totalorder %s31, 0
      %p72 = por %p70, %p71
      %s74 = sadd.s32 %s73, 1
      %p77 = scmp.eq.s32.totalorder %s25, 1
      %p78 = scmp.ne.s32.totalorder %s73, %s75
      %p79 = scmp.eq.s32.totalorder %s25, 0
      %p80 = por %p78, %p79
      %p81 = scmp.ne.s32.totalorder %s73, %s75
      %p82 = scmp.eq.s32.totalorder %s30, 1
      %p83 = por %p81, %p82
      %p84 = scmp.ne.s32.totalorder %s75, %s76
      %p85 = scmp.eq.s32.totalorder %s30, 0
      %p86 = por %p84, %p85
      %p87 = scmp.ne.s32.totalorder %s75, %s76
      %p88 = scmp.eq.s32.totalorder %s31, 1
      %p89 = por %p87, %p88
      %p91 = scmp.ne.s32.totalorder %s76, %s90
      %p92 = scmp.eq.s32.totalorder %s31, 0
      %p93 = por %p91, %p92
      %s95 = sadd.s32 %s94, 1
      %p98 = scmp.eq.s32.totalorder %s25, 1
      %p99 = scmp.ne.s32.totalorder %s94, %s96
      %p100 = scmp.eq.s32.totalorder %s25, 0
      %p101 = por %p99, %p100
      %p102 = scmp.ne.s32.totalorder %s94, %s96
      %p103 = scmp.eq.s32.totalorder %s30, 1
      %p104 = por %p102, %p103
      %p105 = scmp.ne.s32.totalorder %s96, %s97
      %p106 = scmp.eq.s32.totalorder %s30, 0
      %p107 = por %p105, %p106
      %p108 = scmp.ne.s32.totalorder %s96, %s97
      %p109 = scmp.eq.s32.totalorder %s31, 1
      %p110 = por %p108, %p109
      %p112 = scmp.ne.s32.totalorder %s97, %s111
      %p113 = scmp.eq.s32.totalorder %s31, 0
      %p114 = por %p112, %p113
      %s116 = sadd.s32 %s115, 1
      %p119 = scmp.eq.s32.totalorder %s25, 1
      %p120 = scmp.ne.s32.totalorder %s115, %s117
      %p121 = scmp.eq.s32.totalorder %s25, 0
      %p122 = por %p120, %p121
      %p123 = scmp.ne.s32.totalorder %s115, %s117
      %p124 = scmp.eq.s32.totalorder %s30, 1
      %p125 = por %p123, %p124
      %p126 = scmp.ne.s32.totalorder %s117, %s118
      %p127 = scmp.eq.s32.totalorder %s30, 0
      %p128 = por %p126, %p127
      %p129 = scmp.ne.s32.totalorder %s117, %s118
      %p130 = scmp.eq.s32.totalorder %s31, 1
      %p131 = por %p129, %p130
      %p133 = scmp.ne.s32.totalorder %s118, %s132
      %p134 = scmp.eq.s32.totalorder %s31, 0
      %p135 = por %p133, %p134
      %s137 = sadd.s32 %s136, 1
      %p140 = scmp.eq.s32.totalorder %s25, 1
      %p141 = scmp.ne.s32.totalorder %s136, %s138
      %p142 = scmp.eq.s32.totalorder %s25, 0
      %p143 = por %p141, %p142
      %p144 = scmp.ne.s32.totalorder %s136, %s138
      %p145 = scmp.eq.s32.totalorder %s30, 1
      %p146 = por %p144, %p145
      %p147 = scmp.ne.s32.totalorder %s138, %s139
      %p148 = scmp.eq.s32.totalorder %s30, 0
      %p149 = por %p147, %p148
      %p150 = scmp.ne.s32.totalorder %s138, %s139
      %p151 = scmp.eq.s32.totalorder %s31, 1
      %p152 = por %p150, %p151
      %p154 = scmp.ne.s32.totalorder %s139, %s153
      %p155 = scmp.eq.s32.totalorder %s31, 0
      %p156 = por %p154, %p155
      %s158 = sadd.s32 %s157, 1
      %p161 = scmp.eq.s32.totalorder %s25, 1
      %p162 = scmp.ne.s32.totalorder %s157, %s159
      %p163 = scmp.eq.s32.totalorder %s25, 0
      %p164 = por %p162, %p163
      %p165 = scmp.ne.s32.totalorder %s157, %s159
      %p166 = scmp.eq.s32.totalorder %s30, 1
      %p167 = por %p165, %p166
      %p168 = scmp.ne.s32.totalorder %s159, %s160
      %p169 = scmp.eq.s32.totalorder %s30, 0
      %p170 = por %p168, %p169
      %p171 = scmp.ne.s32.totalorder %s159, %s160
      %p172 = scmp.eq.s32.totalorder %s31, 1
      %p173 = por %p171, %p172
      %p175 = scmp.ne.s32.totalorder %s160, %s174
      %p176 = scmp.eq.s32.totalorder %s31, 0
      %p177 = por %p175, %p176
      %s179 = sadd.s32 %s178, 1
      %p182 = scmp.eq.s32.totalorder %s25, 1
      %p183 = scmp.ne.s32.totalorder %s178, %s180
      %p184 = scmp.eq.s32.totalorder %s25, 0
      %p185 = por %p183, %p184
      %p186 = scmp.ne.s32.totalorder %s178, %s180
      %p187 = scmp.eq.s32.totalorder %s30, 1
      %p188 = por %p186, %p187
      %p189 = scmp.ne.s32.totalorder %s180, %s181
      %p190 = scmp.eq.s32.totalorder %s30, 0
      %p191 = por %p189, %p190
      %p192 = scmp.ne.s32.totalorder %s180, %s181
      %p193 = scmp.eq.s32.totalorder %s31, 1
      %p194 = por %p192, %p193
      %p196 = scmp.ne.s32.totalorder %s181, %s195
      %p197 = scmp.eq.s32.totalorder %s31, 0
      %p198 = por %p196, %p197
      %s200 = sadd.s32 %s199, 1
      %p203 = scmp.eq.s32.totalorder %s25, 1
      %p204 = scmp.ne.s32.totalorder %s199, %s201
      %p205 = scmp.eq.s32.totalorder %s25, 0
      %p206 = por %p204, %p205
      %p207 = scmp.ne.s32.totalorder %s199, %s201
      %p208 = scmp.eq.s32.totalorder %s30, 1
      %p209 = por %p207, %p208
      %p210 = scmp.ne.s32.totalorder %s201, %s202
      %p211 = scmp.eq.s32.totalorder %s30, 0
      %p212 = por %p210, %p211
      %p213 = scmp.ne.s32.totalorder %s201, %s202
      %p214 = scmp.eq.s32.totalorder %s31, 1
      %p215 = por %p213, %p214
      %p217 = scmp.ne.s32.totalorder %s202, %s216
      %p218 = scmp.eq.s32.totalorder %s31, 0
      %p219 = por %p217, %p218
      %s221 = sadd.s32 %s220, 1
      %p224 = scmp.eq.s32.totalorder %s25, 1
      %p225 = scmp.ne.s32.totalorder %s220, %s222
      %p226 = scmp.eq.s32.totalorder %s25, 0
      %p227 = por %p225, %p226
      %p228 = scmp.ne.s32.totalorder %s220, %s222
      %p229 = scmp.eq.s32.totalorder %s30, 1
      %p230 = por %p228, %p229
      %p231 = scmp.ne.s32.totalorder %s222, %s223
      %p232 = scmp.eq.s32.totalorder %s30, 0
      %p233 = por %p231, %p232
      %p234 = scmp.ne.s32.totalorder %s222, %s223
      %p235 = scmp.eq.s32.totalorder %s31, 1
      %p236 = por %p234, %p235
      %p238 = scmp.ne.s32.totalorder %s223, %s237
      %p239 = scmp.eq.s32.totalorder %s31, 0
      %p240 = por %p238, %p239
      %s241 = ssub.s32 %s32, %s44
      %s242 = ssub.s32 %s33, %s40
      %s243 = sor.u32 %s241, %s242
      %p244 = scmp.eq.s32.totalorder %s243, 0
      %s246 = sadd.s32 %s245, 1
      %s247 = scalar_select %p244, %s245, %s246
      %p250 = pneg %p244
      %p251 = scmp.eq.s32.totalorder %s25, 1
      %p252 = por %p250, %p251
      %p253 = scmp.ne.s32.totalorder %s245, %s248
      %p254 = scmp.eq.s32.totalorder %s25, 0
      %p255 = por %p253, %p254
      %p256 = scmp.ne.s32.totalorder %s245, %s248
      %p257 = scmp.eq.s32.totalorder %s30, 1
      %p258 = por %p256, %p257
      %p259 = scmp.ne.s32.totalorder %s248, %s249
      %p260 = scmp.eq.s32.totalorder %s30, 0
      %p261 = por %p259, %p260
      %p262 = scmp.ne.s32.totalorder %s248, %s249
      %p263 = scmp.eq.s32.totalorder %s31, 1
      %p264 = por %p262, %p263
      %p266 = scmp.ne.s32.totalorder %s249, %s265
      %p267 = scmp.eq.s32.totalorder %s31, 0
      %p268 = por %p266, %p267
      %p269 = scmp.le.s32.totalorder 1, %s25
      %p270 = scmp.lt.s32.totalorder %s25, 3
      %p271 = pnand %p269, %p270
      %p272 = pneg %p271
      // Predicated region
      $region9: #{tpu_custom_call.1} parent=5 // pred_check
        _
      $region10: #{tpu_custom_call.1} parent=5 // pred_check_branch
        %274 = sbr.rel (%p271) target = $region12
      $region11: #{tpu_custom_call.1} parent=5 // pred_region
        %s275 = ssub.s32 %s25, 1
        // Predicated region
        $region13: #{tpu_custom_call.1} parent=11 // pred_check
          %p276 = pneg %p86
        $region14: #{tpu_custom_call.1} parent=11 // pred_check_branch
          %278 = sbr.rel (%p276) target = $region16
        $region15: #{tpu_custom_call.1} parent=11 // pred_region
          %s280 = ssub.s32 256, 256
          %281 = vsyncadd [#allocation13], %s280
          %s282 = sshll.u32 [#allocation12], 4
          %s283 = int_to_ptr.vmem [resolvable:$true] %s282
          %288 = dma.hbm_to_vmem [thread:$0]  %s1, 256, %s283, [#allocation13], 64, 64, 4
        $region16: #{tpu_custom_call.1} parent=11 // pred_fallthru
          _
        // Predicated region
        $region17: #{tpu_custom_call.1} parent=11 // pred_check
          %p289 = pneg %p107
        $region18: #{tpu_custom_call.1} parent=11 // pred_check_branch
          %291 = sbr.rel (%p289) target = $region20
        $region19: #{tpu_custom_call.1} parent=11 // pred_region
          %s293 = ssub.s32 256, 256
          %294 = vsyncadd [#allocation13], %s293
          %s295 = sshll.u32 [#allocation14], 4
          %s296 = int_to_ptr.vmem [resolvable:$true] %s295
          %301 = dma.hbm_to_vmem [thread:$0]  %s2, 256, %s296, [#allocation13], 64, 64, 4
        $region20: #{tpu_custom_call.1} parent=11 // pred_fallthru
          _
        // Predicated region
        $region21: #{tpu_custom_call.1} parent=11 // pred_check
          %p302 = pneg %p128
        $region22: #{tpu_custom_call.1} parent=11 // pred_check_branch
          %304 = sbr.rel (%p302) target = $region24
        $region23: #{tpu_custom_call.1} parent=11 // pred_region
          %s306 = ssub.s32 64, 64
          %307 = vsyncadd [#allocation16], %s306
          %s309 = sshll.u32 [#allocation15], 4
          %s310 = int_to_ptr.vmem [resolvable:$true] %s309
          %312 = dma.hbm_to_vmem [thread:$0]  %s3, 64, %s310, [#allocation16]
        $region24: #{tpu_custom_call.1} parent=11 // pred_fallthru
          _
        // Predicated region
        $region25: #{tpu_custom_call.1} parent=11 // pred_check
          %p313 = pneg %p149
        $region26: #{tpu_custom_call.1} parent=11 // pred_check_branch
          %315 = sbr.rel (%p313) target = $region28
        $region27: #{tpu_custom_call.1} parent=11 // pred_region
          %s317 = ssub.s32 512, 512
          %318 = vsyncadd [#allocation16], %s317
          %s319 = sshll.u32 [#allocation17], 4
          %s320 = int_to_ptr.vmem [resolvable:$true] %s319
          %325 = dma.hbm_to_vmem [thread:$0]  %s4, 512, %s320, [#allocation16], 64, 64, 4
        $region28: #{tpu_custom_call.1} parent=11 // pred_fallthru
          _
        // Predicated region
        $region29: #{tpu_custom_call.1} parent=11 // pred_check
          %p326 = pneg %p170
        $region30: #{tpu_custom_call.1} parent=11 // pred_check_branch
          %328 = sbr.rel (%p326) target = $region32
        $region31: #{tpu_custom_call.1} parent=11 // pred_region
          %s330 = ssub.s32 16, 16
          %331 = vsyncadd [#allocation19], %s330
          %s333 = sshll.u32 [#allocation18], 4
          %s334 = int_to_ptr.vmem [resolvable:$true] %s333
          %336 = dma.hbm_to_vmem [thread:$0]  %s5, 16, %s334, [#allocation19]
        $region32: #{tpu_custom_call.1} parent=11 // pred_fallthru
          _
        // Predicated region
        $region33: #{tpu_custom_call.1} parent=11 // pred_check
          %p337 = pneg %p191
        $region34: #{tpu_custom_call.1} parent=11 // pred_check_branch
          %339 = sbr.rel (%p337) target = $region36
        $region35: #{tpu_custom_call.1} parent=11 // pred_region
          %s341 = ssub.s32 128, 128
          %342 = vsyncadd [#allocation19], %s341
          %s344 = sshll.u32 [#allocation20], 4
          %s345 = int_to_ptr.vmem [resolvable:$true] %s344
          %347 = dma.hbm_to_vmem [thread:$0]  %s6, 128, %s345, [#allocation19]
        $region36: #{tpu_custom_call.1} parent=11 // pred_fallthru
          _
        // Predicated region
        $region37: #{tpu_custom_call.1} parent=11 // pred_check
          %p348 = pneg %p212
        $region38: #{tpu_custom_call.1} parent=11 // pred_check_branch
          %350 = sbr.rel (%p348) target = $region40
        $region39: #{tpu_custom_call.1} parent=11 // pred_region
          %s352 = ssub.s32 64, 64
          %353 = vsyncadd [#allocation22], %s352
          %s355 = sshll.u32 [#allocation21], 4
          %s356 = int_to_ptr.vmem [resolvable:$true] %s355
          %358 = dma.hbm_to_vmem [thread:$0]  %s7, 64, %s356, [#allocation22]
        $region40: #{tpu_custom_call.1} parent=11 // pred_fallthru
          _
        // Predicated region
        $region41: #{tpu_custom_call.1} parent=11 // pred_check
          %p359 = pneg %p233
        $region42: #{tpu_custom_call.1} parent=11 // pred_check_branch
          %361 = sbr.rel (%p359) target = $region44
        $region43: #{tpu_custom_call.1} parent=11 // pred_region
          %s363 = ssub.s32 512, 512
          %364 = vsyncadd [#allocation22], %s363
          %s365 = sshll.u32 [#allocation23], 4
          %s366 = int_to_ptr.vmem [resolvable:$true] %s365
          %371 = dma.hbm_to_vmem [thread:$0]  %s8, 512, %s366, [#allocation22], 64, 64, 4
        $region44: #{tpu_custom_call.1} parent=11 // pred_fallthru
          _
      $region12: #{tpu_custom_call.1} parent=5 // pred_fallthru
        _
      %p372 = scmp.lt.s32.totalorder %s25, 2
      // Predicated region
      $region45: #{tpu_custom_call.1} parent=5 // pred_check
        %p373 = pneg %p372
      $region46: #{tpu_custom_call.1} parent=5 // pred_check_branch
        %375 = sbr.rel (%p373) target = $region48
      $region47: #{tpu_custom_call.1} parent=5 // pred_region
        // Predicated region
        $region49: #{tpu_custom_call.1} parent=47 // pred_check
          %p376 = pneg %p59
        $region50: #{tpu_custom_call.1} parent=47 // pred_check_branch
          %378 = sbr.rel (%p376) target = $region52
        $region51: #{tpu_custom_call.1} parent=47 // pred_region
          %s379 = sand.u32 %s49, 1
          %s380 = scalar_lea.sflag [#allocation10], %s379
          %s381 = sand.u32 %s49, 1
          %s382 = smul.addr %s381, 4
          %s383 = scalar_lea.vmem [#allocation9], %s382
          %s385 = ssub.s32 64, 64
          %386 = vsyncadd %s380, %s385
          %s387 = sadd.s32 %s33, %s32
          %s388 = smul.addr %s387, 64
          %s389 = scalar_lea.hbm %s0, %s388
          %s391 = sshll.u32 %s383, 4
          %s392 = int_to_ptr.vmem [resolvable:$true] %s391
          %394 = dma.hbm_to_vmem [thread:$0]  %s389, 64, %s392, %s380
        $region52: #{tpu_custom_call.1} parent=47 // pred_fallthru
          _
      $region48: #{tpu_custom_call.1} parent=5 // pred_fallthru
        _
      %p395 = scmp.le.s32.totalorder 1, %s25
      %p396 = scmp.lt.s32.totalorder %s25, 3
      %p397 = pnand %p395, %p396
      %p398 = pneg %p397
      // Predicated region
      $region53: #{tpu_custom_call.1} parent=5 // pred_check
        _
      $region54: #{tpu_custom_call.1} parent=5 // pred_check_branch
        %400 = sbr.rel (%p397) target = $region56
      $region55: #{tpu_custom_call.1} parent=5 // pred_region
        %s401 = ssub.s32 %s25, 1
        %s402 = sand.u32 %s52, 1
        %s403 = scalar_lea.sflag [#allocation10], %s402
        %s404 = sand.u32 %s52, 1
        %s405 = smul.addr %s404, 4
        %s406 = scalar_lea.vmem [#allocation9], %s405
        // Predicated region
        $region57: #{tpu_custom_call.1} parent=55 // pred_check
          %p407 = pneg %p65
        $region58: #{tpu_custom_call.1} parent=55 // pred_check_branch
          %409 = sbr.rel (%p407) target = $region60
        $region59: #{tpu_custom_call.1} parent=55 // pred_region
          %410 = dma.done %s403, 64
        $region60: #{tpu_custom_call.1} parent=55 // pred_fallthru
          _
        // Predicated region
        $region61: #{tpu_custom_call.1} parent=55 // pred_check
          %p411 = pneg %p86
        $region62: #{tpu_custom_call.1} parent=55 // pred_check_branch
          %413 = sbr.rel (%p411) target = $region64
        $region63: #{tpu_custom_call.1} parent=55 // pred_region
          %414 = dma.done [#allocation13], 256
        $region64: #{tpu_custom_call.1} parent=55 // pred_fallthru
          _
        // Predicated region
        $region65: #{tpu_custom_call.1} parent=55 // pred_check
          %p415 = pneg %p107
        $region66: #{tpu_custom_call.1} parent=55 // pred_check_branch
          %417 = sbr.rel (%p415) target = $region68
        $region67: #{tpu_custom_call.1} parent=55 // pred_region
          %418 = dma.done [#allocation13], 256
        $region68: #{tpu_custom_call.1} parent=55 // pred_fallthru
          _
        // Predicated region
        $region69: #{tpu_custom_call.1} parent=55 // pred_check
          %p419 = pneg %p128
        $region70: #{tpu_custom_call.1} parent=55 // pred_check_branch
          %421 = sbr.rel (%p419) target = $region72
        $region71: #{tpu_custom_call.1} parent=55 // pred_region
          %422 = dma.done [#allocation16], 64
        $region72: #{tpu_custom_call.1} parent=55 // pred_fallthru
          _
        // Predicated region
        $region73: #{tpu_custom_call.1} parent=55 // pred_check
          %p423 = pneg %p149
        $region74: #{tpu_custom_call.1} parent=55 // pred_check_branch
          %425 = sbr.rel (%p423) target = $region76
        $region75: #{tpu_custom_call.1} parent=55 // pred_region
          %426 = dma.done [#allocation16], 512
        $region76: #{tpu_custom_call.1} parent=55 // pred_fallthru
          _
        // Predicated region
        $region77: #{tpu_custom_call.1} parent=55 // pred_check
          %p427 = pneg %p170
        $region78: #{tpu_custom_call.1} parent=55 // pred_check_branch
          %429 = sbr.rel (%p427) target = $region80
        $region79: #{tpu_custom_call.1} parent=55 // pred_region
          %430 = dma.done [#allocation19], 16
        $region80: #{tpu_custom_call.1} parent=55 // pred_fallthru
          _
        // Predicated region
        $region81: #{tpu_custom_call.1} parent=55 // pred_check
          %p431 = pneg %p191
        $region82: #{tpu_custom_call.1} parent=55 // pred_check_branch
          %433 = sbr.rel (%p431) target = $region84
        $region83: #{tpu_custom_call.1} parent=55 // pred_region
          %434 = dma.done [#allocation19], 128
        $region84: #{tpu_custom_call.1} parent=55 // pred_fallthru
          _
        // Predicated region
        $region85: #{tpu_custom_call.1} parent=55 // pred_check
          %p435 = pneg %p212
        $region86: #{tpu_custom_call.1} parent=55 // pred_check_branch
          %437 = sbr.rel (%p435) target = $region88
        $region87: #{tpu_custom_call.1} parent=55 // pred_region
          %438 = dma.done [#allocation22], 64
        $region88: #{tpu_custom_call.1} parent=55 // pred_fallthru
          _
        // Predicated region
        $region89: #{tpu_custom_call.1} parent=55 // pred_check
          %p439 = pneg %p233
        $region90: #{tpu_custom_call.1} parent=55 // pred_check_branch
          %441 = sbr.rel (%p439) target = $region92
        $region91: #{tpu_custom_call.1} parent=55 // pred_region
          %442 = dma.done [#allocation22], 512
        $region92: #{tpu_custom_call.1} parent=55 // pred_fallthru
          _
        %s443 = sand.u32 %s52, 1
        %s444 = scalar_lea.sflag [#allocation10], %s443
        %s445 = sand.u32 %s52, 1
        %s446 = smul.addr %s445, 4
        %s447 = scalar_lea.vmem [#allocation9], %s446
        %p448 = pneg %p65
        %p449 = pneg %p62
        %p450 = pneg %p86
        %p451 = pneg %p83
        %p452 = pneg %p107
        %p453 = pneg %p104
        %p454 = pneg %p128
        %p455 = pneg %p125
        %p456 = pneg %p149
        %p457 = pneg %p146
        %p458 = pneg %p170
        %p459 = pneg %p167
        %p460 = pneg %p191
        %p461 = pneg %p188
        %p462 = pneg %p212
        %p463 = pneg %p209
        %p464 = pneg %p233
        %p465 = pneg %p230
        %p466 = pneg %p261
        %p467 = pneg %p258
        %s468 = sand.u32 %s248, 1
        %s469 = scalar_lea.sflag [#allocation11], %s468
        %s470 = sand.u32 %s248, 1
        %s471 = smul.addr %s470, 4
        %s472 = scalar_lea.vmem [#allocation24], %s471
        %p474 = scmp.eq.s32.totalorder %s35, 0
        // Predicated region
        $region93: #{tpu_custom_call.1} parent=55 // pred_check
          %p475 = pneg %p474
        $region94: #{tpu_custom_call.1} parent=55 // pred_check_branch
          %477 = sbr.rel (%p475) target = $region96
        $region95: #{tpu_custom_call.1} parent=55 // pred_region
          %vm478 = vcmask 523264
          %479 = vst.msk [vmem:[#allocation7] sm:$0xff] %vm478, 0.0
          %vm480 = vcmask 518144
          %481 = vst.msk [vmem:[#allocation8] sm:$0x7] %vm480, 0.0
        $region96: #{tpu_custom_call.1} parent=55 // pred_fallthru
          _
        %v482 = vld [vmem:[#allocation21] sm:$0x1]
        %v483 = vld [vmem:[#allocation21 + $0x1] sm:$0x1]
        %v484 = vld [vmem:[#allocation21 + $0x2] sm:$0x1]
        %v485 = vld [vmem:[#allocation21 + $0x3] sm:$0x1]
        %v486 = vld [vmem:[%s406] sm:$0xf]
        %v487 = vld [vmem:[#allocation12] sm:$0xf]
        %v488 = vld [vmem:[#allocation12 + $0x4] sm:$0xf]
        %v489 = vld [vmem:[#allocation12 + $0x8] sm:$0xf]
        %v490 = vld [vmem:[#allocation12 + $0xc] sm:$0xf]
        %v495 = vunpack.c.l.b16 %v487
        %v496 = vunpack.c.l.b16 %v488
        %v497 = vunpack.c.l.b16 %v489
        %v498 = vunpack.c.l.b16 %v490
        %v499 = vpack.c.b16 %v496, %v495
        %v500 = vpack.c.b16 %v498, %v497
        %vm503 = vcmask 261120
        %v505 = vsel %vm503, %v486, 0
        %507 = vmatprep.subr.bf16.mxu0 0
        %508 = vmatpush1.bf16.msra.mxu0 %v499
        %509 = vmatprep.subr.bf16.mxu0 0
        %510 = vmatpush1.bf16.msra.mxu0 %v500
        %511 = vmatprep.subr.bf16.mxu0 0
        %512 = vmatpush1.bf16.msra.mxu0 0
        %513 = vmatprep.subr.bf16.mxu0 0
        %514 = vmatpush1.bf16.msra.mxu0 0
        %515 = vmatprep.subr.bf16.mxu0 0
        %516 = vmatpush1.bf16.msra.mxu0 0
        %517 = vmatprep.subr.bf16.mxu0 0
        %518 = vmatpush1.bf16.msra.mxu0 0
        %519 = vmatprep.subr.bf16.mxu0 0
        %520 = vmatpush1.bf16.msra.mxu0 0
        %521 = vmatprep.subr.bf16.mxu0 0
        %522 = vmatpush1.bf16.msra.mxu0 0
        %523 = vmatprep.subr.bf16.mxu0 0
        %524 = vmatpush1.bf16.msra.mxu0 0
        %525 = vmatprep.subr.bf16.mxu0 0
        %526 = vmatpush1.bf16.msra.mxu0 0
        %527 = vmatprep.subr.bf16.mxu0 0
        %528 = vmatpush1.bf16.msra.mxu0 0
        %529 = vmatprep.subr.bf16.mxu0 0
        %530 = vmatpush1.bf16.msra.mxu0 0
        %531 = vmatprep.subr.bf16.mxu0 0
        %532 = vmatpush1.bf16.msra.mxu0 0
        %533 = vmatprep.subr.bf16.mxu0 0
        %534 = vmatpush1.bf16.msra.mxu0 0
        %535 = vmatprep.subr.bf16.mxu0 0
        %536 = vmatpush1.bf16.msra.mxu0 0
        %537 = vmatprep.subr.bf16.mxu0 0
        %538 = vmatpush1.bf16.msra.mxu0 0
        %539 = vmatprep.mubr.bf16.mxu0 0
        %540 = vmatmul.mubr.bf16.gmra.mrb[0].mxu0 %v505
        %v541 = vpop.f32.mrb[0].mxu0
        %v542 = vadd.f32 0.0, %v541
        %v543 = vpop.f32.mrb[0].mxu0
        %v544 = vpop.f32.mrb[0].mxu0
        %v545 = vpop.f32.mrb[0].mxu0
        %546 = vdwg.mxu0
        %v547 = vld [vmem:[#allocation8] sm:$0x7]
        %v549 = vrot.slane %v542, 5
        %vm551 = vcmask 1042432
        %v552 = vsel %vm551, %v547, %v549
        %vm553 = vcmask 523269
        %554 = vst.msk [vmem:[#allocation8 - $0x5] sm:$0xe0] %vm553, %v542
        %v555 = vld [vmem:[#allocation15] sm:$0x1]
        %v556 = vlaneseq
        %v557 = vshrl.u32 %v556, 7
        %v558 = vsub.s32 0, %v557
        %v559 = vrot.slane %v555, %v558
        %v560 = vmul.f32 %v552, %v559
        %v561 = vld [vmem:[#allocation15 + $0x1] sm:$0x1]
        %v562 = vlaneseq
        %v563 = vshrl.u32 %v562, 7
        %v564 = vsub.s32 0, %v563
        %v565 = vrot.slane %v561, %v564
        %v566 = vmul.f32 %v552, %v565
        %v567 = vmul.f32 %v549, %v565
        %vm570 = vcmask 1046528
        %v571 = vrot.slane %v566, 1
        %v572 = vrot.slane %v567, 1
        %v573 = vsel %vm570, %v571, %v572
        %v575 = vadd.f32 %v560, %v573
        %v576 = vld [vmem:[#allocation15 + $0x2] sm:$0x1]
        %v577 = vlaneseq
        %v578 = vshrl.u32 %v577, 7
        %v579 = vsub.s32 0, %v578
        %v580 = vrot.slane %v576, %v579
        %v581 = vmul.f32 %v552, %v580
        %v582 = vmul.f32 %v549, %v580
        %vm585 = vcmask 1045504
        %v586 = vrot.slane %v581, 2
        %v587 = vrot.slane %v582, 2
        %v588 = vsel %vm585, %v586, %v587
        %v590 = vadd.f32 %v575, %v588
        %v591 = vld [vmem:[#allocation15 + $0x3] sm:$0x1]
        %v592 = vlaneseq
        %v593 = vshrl.u32 %v592, 7
        %v594 = vsub.s32 0, %v593
        %v595 = vrot.slane %v591, %v594
        %v596 = vmul.f32 %v552, %v595
        %v597 = vmul.f32 %v549, %v595
        %vm600 = vcmask 1044480
        %v601 = vrot.slane %v596, 3
        %v602 = vrot.slane %v597, 3
        %v603 = vsel %vm600, %v601, %v602
        %v605 = vadd.f32 %v590, %v603
        %v606 = vlaneseq
        %v607 = vshrl.u32 %v606, 7
        %v608 = vsub.s32 0, %v607
        %v609 = vrot.slane %v482, %v608
        %v610 = vadd.f32 %v605, %v609
        %v611 = vxor.u32 %v610, 2147483648
        %v612 = vmul.f32 %v611, 1.442695
        %v613 = vpow.pop %v612
        %v614 = vadd.f32 %v613, 1.0
        %v615 = vrcp.pop %v614
        %v616 = vmul.f32 1.0, %v615
        %v617 = vmul.f32 %v610, %v616
        %v618 = vlaneseq
        %v619 = vshrl.u32 %v618, 7
        %v620 = vsub.s32 0, %v619
        %v621 = vrot.slane %v485, %v620
        %v622 = vmul.f32 %v617, %v621
        %vm623 = vcmask 523264
        %624 = vst.msk [vmem:[#allocation2] sm:$0xff] %vm623, %v622
        %v625 = vpack.c.bf16 %v622, %v622
        %v626 = vld [vmem:[#allocation17] sm:$0xf]
        %v627 = vld [vmem:[#allocation17 + $0x4] sm:$0xf]
        %v628 = vld [vmem:[#allocation17 + $0x8] sm:$0xf]
        %v629 = vld [vmem:[#allocation17 + $0xc] sm:$0xf]
        %v630 = vld [vmem:[#allocation17 + $0x10] sm:$0xf]
        %v631 = vld [vmem:[#allocation17 + $0x14] sm:$0xf]
        %v632 = vld [vmem:[#allocation17 + $0x18] sm:$0xf]
        %v633 = vld [vmem:[#allocation17 + $0x1c] sm:$0xf]
        %v642 = vunpack.c.l.b16 %v626
        %v643 = vunpack.c.l.b16 %v627
        %v644 = vunpack.c.l.b16 %v628
        %v645 = vunpack.c.l.b16 %v629
        %v646 = vunpack.c.l.b16 %v630
        %v647 = vunpack.c.l.b16 %v631
        %v648 = vunpack.c.l.b16 %v632
        %v649 = vunpack.c.l.b16 %v633
        %v650 = vpack.c.b16 %v643, %v642
        %v651 = vpack.c.b16 %v645, %v644
        %v652 = vpack.c.b16 %v647, %v646
        %v653 = vpack.c.b16 %v649, %v648
        %v659 = vsel %vm623, %v625, 0
        %661 = vmatprep.subr.bf16.mxu0 0
        %662 = vmatpush1.bf16.msra.mxu0 %v650
        %663 = vmatprep.subr.bf16.mxu0 0
        %664 = vmatpush1.bf16.msra.mxu0 %v651
        %665 = vmatprep.subr.bf16.mxu0 0
        %666 = vmatpush1.bf16.msra.mxu0 %v652
        %667 = vmatprep.subr.bf16.mxu0 0
        %668 = vmatpush1.bf16.msra.mxu0 %v653
        %669 = vmatprep.subr.bf16.mxu0 0
        %670 = vmatpush1.bf16.msra.mxu0 0
        %671 = vmatprep.subr.bf16.mxu0 0
        %672 = vmatpush1.bf16.msra.mxu0 0
        %673 = vmatprep.subr.bf16.mxu0 0
        %674 = vmatpush1.bf16.msra.mxu0 0
        %675 = vmatprep.subr.bf16.mxu0 0
        %676 = vmatpush1.bf16.msra.mxu0 0
        %677 = vmatprep.subr.bf16.mxu0 0
        %678 = vmatpush1.bf16.msra.mxu0 0
        %679 = vmatprep.subr.bf16.mxu0 0
        %680 = vmatpush1.bf16.msra.mxu0 0
        %681 = vmatprep.subr.bf16.mxu0 0
        %682 = vmatpush1.bf16.msra.mxu0 0
        %683 = vmatprep.subr.bf16.mxu0 0
        %684 = vmatpush1.bf16.msra.mxu0 0
        %685 = vmatprep.subr.bf16.mxu0 0
        %686 = vmatpush1.bf16.msra.mxu0 0
        %687 = vmatprep.subr.bf16.mxu0 0
        %688 = vmatpush1.bf16.msra.mxu0 0
        %689 = vmatprep.subr.bf16.mxu0 0
        %690 = vmatpush1.bf16.msra.mxu0 0
        %691 = vmatprep.subr.bf16.mxu0 0
        %692 = vmatpush1.bf16.msra.mxu0 0
        %693 = vmatprep.mubr.bf16.mxu0 0
        %694 = vmatmul.mubr.bf16.gmra.mrb[0].mxu0 %v659
        %v695 = vpop.f32.mrb[0].mxu0
        %v696 = vadd.f32 0.0, %v695
        %v697 = vpop.f32.mrb[0].mxu0
        %v698 = vpop.f32.mrb[0].mxu0
        %v699 = vpop.f32.mrb[0].mxu0
        %700 = vdwg.mxu0
        %702 = vrot.lane.b32.xlu0 %v696, 126
        %v703 = vpop.permute.xlu0 %702
        %vm705 = vcmask 64512
        %706 = vst.msk [vmem:[#allocation4] sm:$0xff] %vm705, %v703
        %707 = vrot.lane.b32.xlu0 %v696, 118
        %v708 = vpop.permute.xlu0 %707
        %710 = vst.msk [vmem:[#allocation5] sm:$0xff] %vm705, %v708
        %v711 = vpack.c.bf16 %v696, %v696
        %v712 = vld [vmem:[#allocation18] sm:$0x1]
        %v713 = vlaneseq
        %v714 = vshrl.u32 %v713, 7
        %v715 = vsub.s32 0, %v714
        %v716 = vrot.slane %v483, %v715
        %vm717 = vcmask 15360
        %v719 = vsel %vm717, %v711, 0
        %vm721 = vcmask 1040384
        %v723 = vsel %vm721, %v712, 0
        %725 = vmatprep.subr.bf16.mxu0 0
        %726 = vmatpush1.bf16.msra.mxu0 %v723
        %727 = vmatprep.subr.bf16.mxu0 0
        %728 = vmatpush1.bf16.msra.mxu0 0
        %729 = vmatprep.subr.bf16.mxu0 0
        %730 = vmatpush1.bf16.msra.mxu0 0
        %731 = vmatprep.subr.bf16.mxu0 0
        %732 = vmatpush1.bf16.msra.mxu0 0
        %733 = vmatprep.subr.bf16.mxu0 0
        %734 = vmatpush1.bf16.msra.mxu0 0
        %735 = vmatprep.subr.bf16.mxu0 0
        %736 = vmatpush1.bf16.msra.mxu0 0
        %737 = vmatprep.subr.bf16.mxu0 0
        %738 = vmatpush1.bf16.msra.mxu0 0
        %739 = vmatprep.subr.bf16.mxu0 0
        %740 = vmatpush1.bf16.msra.mxu0 0
        %741 = vmatprep.subr.bf16.mxu0 0
        %742 = vmatpush1.bf16.msra.mxu0 0
        %743 = vmatprep.subr.bf16.mxu0 0
        %744 = vmatpush1.bf16.msra.mxu0 0
        %745 = vmatprep.subr.bf16.mxu0 0
        %746 = vmatpush1.bf16.msra.mxu0 0
        %747 = vmatprep.subr.bf16.mxu0 0
        %748 = vmatpush1.bf16.msra.mxu0 0
        %749 = vmatprep.subr.bf16.mxu0 0
        %750 = vmatpush1.bf16.msra.mxu0 0
        %751 = vmatprep.subr.bf16.mxu0 0
        %752 = vmatpush1.bf16.msra.mxu0 0
        %753 = vmatprep.subr.bf16.mxu0 0
        %754 = vmatpush1.bf16.msra.mxu0 0
        %755 = vmatprep.subr.bf16.mxu0 0
        %756 = vmatpush1.bf16.msra.mxu0 0
        %757 = vmatprep.mubr.bf16.mxu0 0
        %758 = vmatmul.mubr.bf16.gmra.mrb[0].mxu0 %v719
        %v759 = vpop.f32.mrb[0].mxu0
        %v760 = vadd.f32 %v716, %v759
        %v761 = vpop.f32.mrb[0].mxu0
        %v762 = vpop.f32.mrb[0].mxu0
        %v763 = vpop.f32.mrb[0].mxu0
        %764 = vdwg.mxu0
        %v765 = vmax.f32 %v760, 0.0
        %vm766 = vcmp.ne.f32.partialorder %v760, %v760
        %v767 = vadd.f32 %v760, 0.0
        %v768 = vand.u32 2147483647, %v760
        %v769 = vsub.f32 0.0, %v768
        %v770 = vmul.f32 %v769, 1.442695
        %v771 = vpow.pop %v770
        %v772 = vadd.f32 %v771, 1.0
        %v773 = vlog2.pop %v772
        %v774 = vmul.f32 %v773, 0.6931472
        %v775 = vmul.f32 -0.5, %v771
        %v776 = vadd.f32 %v775, 1.0
        %v777 = vmul.f32 %v776, %v771
        %v778 = vand.u32 2147483647, %v771
        %vm779 = vcmp.lt.f32.partialorder %v778, 0.0004427343
        %v780 = vsel %vm779, %v777, %v774
        %v781 = vadd.f32 %v765, %v780
        %v782 = vsel %vm766, %v767, %v781
        %783 = vst.msk [vmem:[#allocation3] sm:$0xff] %vm623, %v782
        %v784 = vld [vmem:[#allocation20] sm:$0xff]
        %v785 = vld [vmem:[#allocation7] sm:$0xff]
        %v786 = vld [vmem:[#allocation3] sm:$0xff]
        %v787 = vld [vmem:[#allocation2] sm:$0xff]
        %v788 = vld [vmem:[#allocation4] sm:$0xff]
        %789 = vxpose.xlu0.b32.start [1/16] %v788, 128
        %790 = vxpose.xlu0.b32.cont [2/16] 0.0, 128
        %791 = vxpose.xlu0.b32.cont [3/16] 0.0, 128
        %792 = vxpose.xlu0.b32.cont [4/16] 0.0, 128
        %793 = vxpose.xlu0.b32.cont [5/16] 0.0, 128
        %794 = vxpose.xlu0.b32.cont [6/16] 0.0, 128
        %795 = vxpose.xlu0.b32.cont [7/16] 0.0, 128
        %796 = vxpose.xlu0.b32.cont [8/16] 0.0, 128
        %797 = vxpose.xlu0.b32.cont [9/16] 0.0, 128
        %798 = vxpose.xlu0.b32.cont [10/16] 0.0, 128
        %799 = vxpose.xlu0.b32.cont [11/16] 0.0, 128
        %800 = vxpose.xlu0.b32.cont [12/16] 0.0, 128
        %801 = vxpose.xlu0.b32.cont [13/16] 0.0, 128
        %802 = vxpose.xlu0.b32.cont [14/16] 0.0, 128
        %803 = vxpose.xlu0.b32.cont [15/16] 0.0, 128
        %804 = vxpose.xlu0.b32.end [16/16] 0.0, 128
        %v805 = vpop.trf.xlu0
        %v806 = vpop.trf.xlu0
        %v807 = vpop.trf.xlu0
        %v808 = vpop.trf.xlu0
        %v809 = vpop.trf.xlu0
        %v810 = vpop.trf.xlu0
        %v811 = vpop.trf.xlu0
        %v812 = vpop.trf.xlu0
        %v813 = vpop.trf.xlu0
        %v814 = vpop.trf.xlu0
        %v815 = vpop.trf.xlu0
        %v816 = vpop.trf.xlu0
        %v817 = vpop.trf.xlu0
        %v818 = vpop.trf.xlu0
        %v819 = vpop.trf.xlu0
        %v820 = vpop.trf.xlu0
        %v821 = vld [vmem:[#allocation5] sm:$0xff]
        %822 = vxpose.xlu0.b32.start [1/16] %v821, 128
        %823 = vxpose.xlu0.b32.cont [2/16] 0.0, 128
        %824 = vxpose.xlu0.b32.cont [3/16] 0.0, 128
        %825 = vxpose.xlu0.b32.cont [4/16] 0.0, 128
        %826 = vxpose.xlu0.b32.cont [5/16] 0.0, 128
        %827 = vxpose.xlu0.b32.cont [6/16] 0.0, 128
        %828 = vxpose.xlu0.b32.cont [7/16] 0.0, 128
        %829 = vxpose.xlu0.b32.cont [8/16] 0.0, 128
        %830 = vxpose.xlu0.b32.cont [9/16] 0.0, 128
        %831 = vxpose.xlu0.b32.cont [10/16] 0.0, 128
        %832 = vxpose.xlu0.b32.cont [11/16] 0.0, 128
        %833 = vxpose.xlu0.b32.cont [12/16] 0.0, 128
        %834 = vxpose.xlu0.b32.cont [13/16] 0.0, 128
        %835 = vxpose.xlu0.b32.cont [14/16] 0.0, 128
        %836 = vxpose.xlu0.b32.cont [15/16] 0.0, 128
        %837 = vxpose.xlu0.b32.end [16/16] 0.0, 128
        %v838 = vpop.trf.xlu0
        %v839 = vpop.trf.xlu0
        %v840 = vpop.trf.xlu0
        %v841 = vpop.trf.xlu0
        %v842 = vpop.trf.xlu0
        %v843 = vpop.trf.xlu0
        %v844 = vpop.trf.xlu0
        %v845 = vpop.trf.xlu0
        %v846 = vpop.trf.xlu0
        %v847 = vpop.trf.xlu0
        %v848 = vpop.trf.xlu0
        %v849 = vpop.trf.xlu0
        %v850 = vpop.trf.xlu0
        %v851 = vpop.trf.xlu0
        %v852 = vpop.trf.xlu0
        %v853 = vpop.trf.xlu0
        %v854 = vlaneseq
        %v855 = vshrl.u32 %v854, 7
        %v856 = vsub.s32 0, %v855
        %v857 = vrot.slane %v786, %v856
        %v858 = vmul.f32 %v857, %v784
        %v859 = vmul.f32 %v858, 1.442695
        %v860 = vpow.pop %v859
        %v861 = vmul.f32 %v786, %v787
        %863 = vset.pattern.permute.xlu0 0
        %864 = vperm.xlu0 %863, %v805
        %v865 = vpop.permute.xlu0 %864
        %v867 = vlaneseq
        %v868 = vshrl.u32 %v867, 7
        %v869 = vsub.s32 0, %v868
        %v870 = vrot.slane %v861, %v869
        %v871 = vmul.f32 %v865, %v870
        %v872 = vmul.f32 %v860, %v785
        %v873 = vadd.f32 %v872, %v871
        %875 = vset.pattern.permute.xlu0 0
        %876 = vperm.xlu0 %875, %v838
        %v877 = vpop.permute.xlu0 %876
        %v879 = vmul.f32 %v877, %v873
        %v880 = vsel %vm623, %v879, 0.0
        %v881 = vrot.slane %v880, 4
        %v882 = vadd.f32 %v880, %v881
        %v883 = vrot.slane %v882, 2
        %v884 = vadd.f32 %v882, %v883
        %v885 = vrot.slane %v884, 1
        %v886 = vadd.f32 %v884, %v885
        %v887 = vlaneseq
        %v888 = vshrl.u32 %v887, 7
        %v889 = vsub.s32 1, %v888
        %v890 = vrot.slane %v786, %v889
        %v891 = vmul.f32 %v890, %v784
        %v892 = vmul.f32 %v891, 1.442695
        %v893 = vpow.pop %v892
        %894 = vset.pattern.permute.xlu0 1
        %895 = vperm.xlu0 %894, %v805
        %v896 = vpop.permute.xlu0 %895
        %v898 = vlaneseq
        %v899 = vshrl.u32 %v898, 7
        %v900 = vsub.s32 1, %v899
        %v901 = vrot.slane %v861, %v900
        %v902 = vmul.f32 %v896, %v901
        %v903 = vmul.f32 %v893, %v873
        %v904 = vadd.f32 %v903, %v902
        %905 = vset.pattern.permute.xlu0 1
        %906 = vperm.xlu0 %905, %v838
        %v907 = vpop.permute.xlu0 %906
        %v909 = vmul.f32 %v907, %v904
        %v910 = vsel %vm623, %v909, 0.0
        %v911 = vrot.slane %v910, 4
        %v912 = vadd.f32 %v910, %v911
        %v913 = vrot.slane %v912, 2
        %v914 = vadd.f32 %v912, %v913
        %v915 = vrot.slane %v914, 1
        %v916 = vadd.f32 %v914, %v915
        %v917 = vlaneseq
        %v918 = vshrl.u32 %v917, 7
        %v919 = vsub.s32 2, %v918
        %v920 = vrot.slane %v786, %v919
        %v921 = vmul.f32 %v920, %v784
        %v922 = vmul.f32 %v921, 1.442695
        %v923 = vpow.pop %v922
        %924 = vset.pattern.permute.xlu0 2
        %925 = vperm.xlu0 %924, %v805
        %v926 = vpop.permute.xlu0 %925
        %v928 = vlaneseq
        %v929 = vshrl.u32 %v928, 7
        %v930 = vsub.s32 2, %v929
        %v931 = vrot.slane %v861, %v930
        %v932 = vmul.f32 %v926, %v931
        %v933 = vmul.f32 %v923, %v904
        %v934 = vadd.f32 %v933, %v932
        %935 = vset.pattern.permute.xlu0 2
        %936 = vperm.xlu0 %935, %v838
        %v937 = vpop.permute.xlu0 %936
        %v939 = vmul.f32 %v937, %v934
        %v940 = vsel %vm623, %v939, 0.0
        %v941 = vrot.slane %v940, 4
        %v942 = vadd.f32 %v940, %v941
        %v943 = vrot.slane %v942, 2
        %v944 = vadd.f32 %v942, %v943
        %v945 = vrot.slane %v944, 1
        %v946 = vadd.f32 %v944, %v945
        %v947 = vlaneseq
        %v948 = vshrl.u32 %v947, 7
        %v949 = vsub.s32 3, %v948
        %v950 = vrot.slane %v786, %v949
        %v951 = vmul.f32 %v950, %v784
        %v952 = vmul.f32 %v951, 1.442695
        %v953 = vpow.pop %v952
        %954 = vset.pattern.permute.xlu0 3
        %955 = vperm.xlu0 %954, %v805
        %v956 = vpop.permute.xlu0 %955
        %v958 = vlaneseq
        %v959 = vshrl.u32 %v958, 7
        %v960 = vsub.s32 3, %v959
        %v961 = vrot.slane %v861, %v960
        %v962 = vmul.f32 %v956, %v961
        %v963 = vmul.f32 %v953, %v934
        %v964 = vadd.f32 %v963, %v962
        %965 = vset.pattern.permute.xlu0 3
        %966 = vperm.xlu0 %965, %v838
        %v967 = vpop.permute.xlu0 %966
        %v969 = vmul.f32 %v967, %v964
        %v970 = vsel %vm623, %v969, 0.0
        %v971 = vrot.slane %v970, 4
        %v972 = vadd.f32 %v970, %v971
        %v973 = vrot.slane %v972, 2
        %v974 = vadd.f32 %v972, %v973
        %v975 = vrot.slane %v974, 1
        %v976 = vadd.f32 %v974, %v975
        %v977 = vlaneseq
        %v978 = vshrl.u32 %v977, 7
        %v979 = vsub.s32 4, %v978
        %v980 = vrot.slane %v786, %v979
        %v981 = vmul.f32 %v980, %v784
        %v982 = vmul.f32 %v981, 1.442695
        %v983 = vpow.pop %v982
        %984 = vset.pattern.permute.xlu0 4
        %985 = vperm.xlu0 %984, %v805
        %v986 = vpop.permute.xlu0 %985
        %v988 = vlaneseq
        %v989 = vshrl.u32 %v988, 7
        %v990 = vsub.s32 4, %v989
        %v991 = vrot.slane %v861, %v990
        %v992 = vmul.f32 %v986, %v991
        %v993 = vmul.f32 %v983, %v964
        %v994 = vadd.f32 %v993, %v992
        %995 = vset.pattern.permute.xlu0 4
        %996 = vperm.xlu0 %995, %v838
        %v997 = vpop.permute.xlu0 %996
        %v999 = vmul.f32 %v997, %v994
        %v1000 = vsel %vm623, %v999, 0.0
        %v1001 = vrot.slane %v1000, 4
        %v1002 = vadd.f32 %v1000, %v1001
        %v1003 = vrot.slane %v1002, 2
        %v1004 = vadd.f32 %v1002, %v1003
        %v1005 = vrot.slane %v1004, 1
        %v1006 = vadd.f32 %v1004, %v1005
        %v1007 = vlaneseq
        %v1008 = vshrl.u32 %v1007, 7
        %v1009 = vsub.s32 5, %v1008
        %v1010 = vrot.slane %v786, %v1009
        %v1011 = vmul.f32 %v1010, %v784
        %v1012 = vmul.f32 %v1011, 1.442695
        %v1013 = vpow.pop %v1012
        %1014 = vset.pattern.permute.xlu0 5
        %1015 = vperm.xlu0 %1014, %v805
        %v1016 = vpop.permute.xlu0 %1015
        %v1018 = vlaneseq
        %v1019 = vshrl.u32 %v1018, 7
        %v1020 = vsub.s32 5, %v1019
        %v1021 = vrot.slane %v861, %v1020
        %v1022 = vmul.f32 %v1016, %v1021
        %v1023 = vmul.f32 %v1013, %v994
        %v1024 = vadd.f32 %v1023, %v1022
        %1025 = vset.pattern.permute.xlu0 5
        %1026 = vperm.xlu0 %1025, %v838
        %v1027 = vpop.permute.xlu0 %1026
        %v1029 = vmul.f32 %v1027, %v1024
        %v1030 = vsel %vm623, %v1029, 0.0
        %v1031 = vrot.slane %v1030, 4
        %v1032 = vadd.f32 %v1030, %v1031
        %v1033 = vrot.slane %v1032, 2
        %v1034 = vadd.f32 %v1032, %v1033
        %v1035 = vrot.slane %v1034, 1
        %v1036 = vadd.f32 %v1034, %v1035
        %v1037 = vlaneseq
        %v1038 = vshrl.u32 %v1037, 7
        %v1039 = vsub.s32 6, %v1038
        %v1040 = vrot.slane %v786, %v1039
        %v1041 = vmul.f32 %v1040, %v784
        %v1042 = vmul.f32 %v1041, 1.442695
        %v1043 = vpow.pop %v1042
        %1044 = vset.pattern.permute.xlu0 6
        %1045 = vperm.xlu0 %1044, %v805
        %v1046 = vpop.permute.xlu0 %1045
        %v1048 = vlaneseq
        %v1049 = vshrl.u32 %v1048, 7
        %v1050 = vsub.s32 6, %v1049
        %v1051 = vrot.slane %v861, %v1050
        %v1052 = vmul.f32 %v1046, %v1051
        %v1053 = vmul.f32 %v1043, %v1024
        %v1054 = vadd.f32 %v1053, %v1052
        %1055 = vset.pattern.permute.xlu0 6
        %1056 = vperm.xlu0 %1055, %v838
        %v1057 = vpop.permute.xlu0 %1056
        %v1059 = vmul.f32 %v1057, %v1054
        %v1060 = vsel %vm623, %v1059, 0.0
        %v1061 = vrot.slane %v1060, 4
        %v1062 = vadd.f32 %v1060, %v1061
        %v1063 = vrot.slane %v1062, 2
        %v1064 = vadd.f32 %v1062, %v1063
        %v1065 = vrot.slane %v1064, 1
        %v1066 = vadd.f32 %v1064, %v1065
        %v1067 = vlaneseq
        %v1068 = vshrl.u32 %v1067, 7
        %v1069 = vsub.s32 7, %v1068
        %v1070 = vrot.slane %v786, %v1069
        %v1071 = vmul.f32 %v1070, %v784
        %v1072 = vmul.f32 %v1071, 1.442695
        %v1073 = vpow.pop %v1072
        %1074 = vset.pattern.permute.xlu0 7
        %1075 = vperm.xlu0 %1074, %v805
        %v1076 = vpop.permute.xlu0 %1075
        %v1078 = vlaneseq
        %v1079 = vshrl.u32 %v1078, 7
        %v1080 = vsub.s32 7, %v1079
        %v1081 = vrot.slane %v861, %v1080
        %v1082 = vmul.f32 %v1076, %v1081
        %v1083 = vmul.f32 %v1073, %v1054
        %v1084 = vadd.f32 %v1083, %v1082
        %1085 = vset.pattern.permute.xlu0 7
        %1086 = vperm.xlu0 %1085, %v838
        %v1087 = vpop.permute.xlu0 %1086
        %v1089 = vmul.f32 %v1087, %v1084
        %v1090 = vsel %vm623, %v1089, 0.0
        %v1091 = vrot.slane %v1090, 4
        %v1092 = vadd.f32 %v1090, %v1091
        %v1093 = vrot.slane %v1092, 2
        %v1094 = vadd.f32 %v1092, %v1093
        %v1095 = vrot.slane %v1094, 1
        %v1096 = vadd.f32 %v1094, %v1095
        %v1097 = vsel %vm721, %v886, %v916
        %vm1098 = vcmask 1041408
        %v1099 = vsel %vm1098, %v1097, %v946
        %v1100 = vsel %vm551, %v1099, %v976
        %vm1101 = vcmask 1043456
        %v1102 = vsel %vm1101, %v1100, %v1006
        %v1103 = vsel %vm600, %v1102, %v1036
        %v1104 = vsel %vm585, %v1103, %v1066
        %v1105 = vsel %vm570, %v1104, %v1096
        %1106 = vst.msk [vmem:[#allocation6] sm:$0xff] %vm623, %v1105
        %1107 = vst.msk [vmem:[#allocation7] sm:$0xff] %vm623, %v1084
        %v1108 = vld [vmem:[#allocation14] sm:$0xf]
        %v1109 = vld [vmem:[#allocation14 + $0x4] sm:$0xf]
        %v1110 = vld [vmem:[#allocation14 + $0x8] sm:$0xf]
        %v1111 = vld [vmem:[#allocation14 + $0xc] sm:$0xf]
        %v1116 = vunpack.c.l.b16 %v1108
        %v1117 = vunpack.c.l.b16 %v1109
        %v1118 = vunpack.c.l.b16 %v1110
        %v1119 = vunpack.c.l.b16 %v1111
        %v1120 = vpack.c.b16 %v1117, %v1116
        %v1121 = vpack.c.b16 %v1119, %v1118
        %1124 = vmatprep.subr.bf16.mxu0 0
        %1125 = vmatpush1.bf16.msra.mxu0 %v1120
        %1126 = vmatprep.subr.bf16.mxu0 0
        %1127 = vmatpush1.bf16.msra.mxu0 %v1121
        %1128 = vmatprep.subr.bf16.mxu0 0
        %1129 = vmatpush1.bf16.msra.mxu0 0
        %1130 = vmatprep.subr.bf16.mxu0 0
        %1131 = vmatpush1.bf16.msra.mxu0 0
        %1132 = vmatprep.subr.bf16.mxu0 0
        %1133 = vmatpush1.bf16.msra.mxu0 0
        %1134 = vmatprep.subr.bf16.mxu0 0
        %1135 = vmatpush1.bf16.msra.mxu0 0
        %1136 = vmatprep.subr.bf16.mxu0 0
        %1137 = vmatpush1.bf16.msra.mxu0 0
        %1138 = vmatprep.subr.bf16.mxu0 0
        %1139 = vmatpush1.bf16.msra.mxu0 0
        %1140 = vmatprep.subr.bf16.mxu0 0
        %1141 = vmatpush1.bf16.msra.mxu0 0
        %1142 = vmatprep.subr.bf16.mxu0 0
        %1143 = vmatpush1.bf16.msra.mxu0 0
        %1144 = vmatprep.subr.bf16.mxu0 0
        %1145 = vmatpush1.bf16.msra.mxu0 0
        %1146 = vmatprep.subr.bf16.mxu0 0
        %1147 = vmatpush1.bf16.msra.mxu0 0
        %1148 = vmatprep.subr.bf16.mxu0 0
        %1149 = vmatpush1.bf16.msra.mxu0 0
        %1150 = vmatprep.subr.bf16.mxu0 0
        %1151 = vmatpush1.bf16.msra.mxu0 0
        %1152 = vmatprep.subr.bf16.mxu0 0
        %1153 = vmatpush1.bf16.msra.mxu0 0
        %1154 = vmatprep.subr.bf16.mxu0 0
        %1155 = vmatpush1.bf16.msra.mxu0 0
        %1156 = vmatprep.mubr.bf16.mxu0 0
        %1157 = vmatmul.mubr.bf16.gmra.mrb[0].mxu0 %v505
        %v1158 = vpop.f32.mrb[0].mxu0
        %v1159 = vadd.f32 0.0, %v1158
        %v1160 = vpop.f32.mrb[0].mxu0
        %v1161 = vpop.f32.mrb[0].mxu0
        %v1162 = vpop.f32.mrb[0].mxu0
        %1163 = vdwg.mxu0
        %v1164 = vld [vmem:[#allocation6] sm:$0xff]
        %v1165 = vld [vmem:[#allocation2] sm:$0xff]
        %v1166 = vlaneseq
        %v1167 = vshrl.u32 %v1166, 7
        %v1168 = vsub.s32 0, %v1167
        %v1169 = vrot.slane %v484, %v1168
        %v1170 = vmul.f32 %v1165, %v1169
        %v1171 = vadd.f32 %v1164, %v1170
        %v1172 = vxor.u32 %v1159, 2147483648
        %v1173 = vmul.f32 %v1172, 1.442695
        %v1174 = vpow.pop %v1173
        %v1175 = vadd.f32 %v1174, 1.0
        %v1176 = vrcp.pop %v1175
        %v1177 = vmul.f32 1.0, %v1176
        %v1178 = vmul.f32 %v1159, %v1177
        %v1179 = vmul.f32 %v1171, %v1178
        %v1180 = vpack.c.bf16 %v1179, %v1179
        %v1181 = vld [vmem:[#allocation23] sm:$0xf]
        %v1182 = vld [vmem:[#allocation23 + $0x4] sm:$0xf]
        %v1183 = vld [vmem:[#allocation23 + $0x8] sm:$0xf]
        %v1184 = vld [vmem:[#allocation23 + $0xc] sm:$0xf]
        %v1185 = vld [vmem:[#allocation23 + $0x10] sm:$0xf]
        %v1186 = vld [vmem:[#allocation23 + $0x14] sm:$0xf]
        %v1187 = vld [vmem:[#allocation23 + $0x18] sm:$0xf]
        %v1188 = vld [vmem:[#allocation23 + $0x1c] sm:$0xf]
        %v1197 = vunpack.c.l.b16 %v1181
        %v1198 = vunpack.c.l.b16 %v1182
        %v1199 = vunpack.c.l.b16 %v1183
        %v1200 = vunpack.c.l.b16 %v1184
        %v1201 = vunpack.c.l.b16 %v1185
        %v1202 = vunpack.c.l.b16 %v1186
        %v1203 = vunpack.c.l.b16 %v1187
        %v1204 = vunpack.c.l.b16 %v1188
        %v1205 = vpack.c.b16 %v1198, %v1197
        %v1206 = vpack.c.b16 %v1200, %v1199
        %v1207 = vpack.c.b16 %v1202, %v1201
        %v1208 = vpack.c.b16 %v1204, %v1203
        %v1214 = vsel %vm623, %v1180, 0
        %1216 = vmatprep.subr.bf16.mxu0 0
        %1217 = vmatpush1.bf16.msra.mxu0 %v1205
        %1218 = vmatprep.subr.bf16.mxu0 0
        %1219 = vmatpush1.bf16.msra.mxu0 %v1206
        %1220 = vmatprep.subr.bf16.mxu0 0
        %1221 = vmatpush1.bf16.msra.mxu0 %v1207
        %1222 = vmatprep.subr.bf16.mxu0 0
        %1223 = vmatpush1.bf16.msra.mxu0 %v1208
        %1224 = vmatprep.subr.bf16.mxu0 0
        %1225 = vmatpush1.bf16.msra.mxu0 0
        %1226 = vmatprep.subr.bf16.mxu0 0
        %1227 = vmatpush1.bf16.msra.mxu0 0
        %1228 = vmatprep.subr.bf16.mxu0 0
        %1229 = vmatpush1.bf16.msra.mxu0 0
        %1230 = vmatprep.subr.bf16.mxu0 0
        %1231 = vmatpush1.bf16.msra.mxu0 0
        %1232 = vmatprep.subr.bf16.mxu0 0
        %1233 = vmatpush1.bf16.msra.mxu0 0
        %1234 = vmatprep.subr.bf16.mxu0 0
        %1235 = vmatpush1.bf16.msra.mxu0 0
        %1236 = vmatprep.subr.bf16.mxu0 0
        %1237 = vmatpush1.bf16.msra.mxu0 0
        %1238 = vmatprep.subr.bf16.mxu0 0
        %1239 = vmatpush1.bf16.msra.mxu0 0
        %1240 = vmatprep.subr.bf16.mxu0 0
        %1241 = vmatpush1.bf16.msra.mxu0 0
        %1242 = vmatprep.subr.bf16.mxu0 0
        %1243 = vmatpush1.bf16.msra.mxu0 0
        %1244 = vmatprep.subr.bf16.mxu0 0
        %1245 = vmatpush1.bf16.msra.mxu0 0
        %1246 = vmatprep.subr.bf16.mxu0 0
        %1247 = vmatpush1.bf16.msra.mxu0 0
        %1248 = vmatprep.mubr.bf16.mxu0 0
        %1249 = vmatmul.mubr.bf16.gmra.mrb[0].mxu0 %v1214
        %v1250 = vpop.f32.mrb[0].mxu0
        %v1251 = vadd.f32 0.0, %v1250
        %v1252 = vpop.f32.mrb[0].mxu0
        %v1253 = vpop.f32.mrb[0].mxu0
        %v1254 = vpop.f32.mrb[0].mxu0
        %1255 = vdwg.mxu0
        %v1256 = vld [vmem:[%s406] sm:$0xf]
        %v1257 = vunpack.c.l.bf16 %v1256
        %v1258 = vadd.f32 %v1257, %v1251
        %v1259 = vpack.c.bf16 %v1258, %v1258
        %vm1260 = vcmask 257024
        %1261 = vst.msk [vmem:[%s472] sm:$0xf] %vm1260, %v1259
        %s1262 = sand.u32 %s248, 1
        %s1263 = scalar_lea.sflag [#allocation11], %s1262
        %s1264 = sand.u32 %s248, 1
        %s1265 = smul.addr %s1264, 4
        %s1266 = scalar_lea.vmem [#allocation24], %s1265
        // Predicated region
        $region97: #{tpu_custom_call.1} parent=55 // pred_check
          %p1267 = pneg %p258
        $region98: #{tpu_custom_call.1} parent=55 // pred_check_branch
          %1269 = sbr.rel (%p1267) target = $region100
        $region99: #{tpu_custom_call.1} parent=55 // pred_region
          %s1271 = ssub.s32 64, 64
          %1272 = vsyncadd %s1263, %s1271
          %s1273 = sadd.s32 %s35, %s34
          %s1274 = smul.addr %s1273, 64
          %s1275 = scalar_lea.hbm %s9, %s1274
          %s1277 = sshll.u32 %s1266, 4
          %s1278 = int_to_ptr.vmem [resolvable:$true] %s1277
          %1280 = dma.vmem_to_hbm [thread:$0]  %s1278, 64, %s1275, %s1263
        $region100: #{tpu_custom_call.1} parent=55 // pred_fallthru
          _
      $region56: #{tpu_custom_call.1} parent=5 // pred_fallthru
        _
      %p1281 = scmp.le.s32.totalorder 2, %s25
      // Predicated region
      $region101: #{tpu_custom_call.1} parent=5 // pred_check
        %p1282 = pneg %p1281
      $region102: #{tpu_custom_call.1} parent=5 // pred_check_branch
        %1284 = sbr.rel (%p1282) target = $region104
      $region103: #{tpu_custom_call.1} parent=5 // pred_region
        %s1285 = ssub.s32 %s25, 2
        // Predicated region
        $region105: #{tpu_custom_call.1} parent=103 // pred_check
          %p1286 = pneg %p264
        $region106: #{tpu_custom_call.1} parent=103 // pred_check_branch
          %1288 = sbr.rel (%p1286) target = $region108
        $region107: #{tpu_custom_call.1} parent=103 // pred_region
          %s1289 = sand.u32 %s249, 1
          %s1290 = scalar_lea.sflag [#allocation11], %s1289
          %s1291 = sand.u32 %s249, 1
          %s1292 = smul.addr %s1291, 4
          %s1293 = scalar_lea.vmem [#allocation24], %s1292
          %1294 = dma.done %s1290, 64
        $region108: #{tpu_custom_call.1} parent=103 // pred_fallthru
          _
      $region104: #{tpu_custom_call.1} parent=5 // pred_fallthru
        _
    $region6: #{tpu_custom_call.1} parent=1 // loop_footer
      %s29 = sadd.s32 1, %s25
    $region7: #{tpu_custom_call.1} parent=1 // loop_footer_branch
      %24 = sbr.rel target = $region3
    $region8: #{tpu_custom_call.1} parent=1 // loop_exit
      _
    %1295 = vsyncpa [#allocation10], 1
    %s1296 = scalar_lea.sflag [#allocation10], 1
    %1297 = vsyncpa %s1296, 1
    %1298 = vsyncpa [#allocation13], 1
    %1299 = vsyncpa [#allocation16], 1
    %1300 = vsyncpa [#allocation19], 1
    %1301 = vsyncpa [#allocation22], 1
    %1302 = vsyncpa [#allocation11], 1
    %s1303 = scalar_lea.sflag [#allocation11], 1
    %1304 = vsyncpa %s1303, 1

</llo_original>
